<compile_context>
chip_gen: v5e
topology: v5e:2x2
jax: 0.10.0
libtpu: 0.0.40
codegen_flags: <defaults>
</compile_context>

<pallas_src>
import functools

import jax
import jax.numpy as jnp
import numpy as np
from jax import lax
from jax.experimental import pallas as pl
from jax.experimental.pallas import tpu as pltpu


def bilstm_classifier_kernel(emb_ref, len_ref, wih_ref, bih_ref, whh_ref,
                             w1_ref, b1_ref, w2_ref, b2_ref,
                             out_ref, gates_ref, *, T, B, H):
    H2 = 2 * H      # lane width of one gate slice: [fwd H | bwd H]

    # ---- prologue: input projection for BOTH directions, ALL timesteps -----
    # emb_ref row-block t holds [x_t | x_{T-1-t}] along lanes; wih_ref is the
    # matching block-structured (2D, 8H) weight whose gate columns are
    # interleaved per gate ([i_f i_b | f_f f_b | o_f o_b | g_f g_b]).  Gate
    # biases are folded in once so the serial loop never touches x @ W_ih + b.
    gates_ref[...] = (
        jnp.dot(emb_ref[...], wih_ref[...], preferred_element_type=jnp.float32)
        + bih_ref[...])

    whh = whh_ref[...]                                # (2H, 8H) block-diagonal
    lens = len_ref[...]                               # (B, 1) int32
    lens_b = jnp.broadcast_to(lens, (B, H2))          # hoisted out of the loop

    lane = lax.broadcasted_iota(jnp.int32, (B, H2), 1)
    is_fwd_lane = lane < H                            # first H lanes = forward

    zeros = jnp.zeros((B, H2), jnp.float32)

    def body(t, carry):
        h, c, s = carry                               # each (B, 2H), lane-packed

        # One recurrent matmul per step serves both directions (block-diagonal
        # W_hh) and one contiguous load fetches both directions' input gates.
        off = pl.multiple_of(t * B, B)
        g = (gates_ref[pl.ds(off, B), :]
             + jnp.dot(h, whh, preferred_element_type=jnp.float32))  # (B, 8H)

        # Gate column order is [i | f | o | g]: one 6H-wide sigmoid, one
        # 2H-wide tanh (contiguous lane spans -> fewer EUP vreg passes).
        sig = jax.nn.sigmoid(g[:, :3 * H2])
        gg = jnp.tanh(g[:, 3 * H2:])
        i_g = sig[:, 0 * H2:1 * H2]
        f_g = sig[:, 1 * H2:2 * H2]
        o_g = sig[:, 2 * H2:3 * H2]
        c2 = f_g * c + i_g * gg
        h2 = o_g * jnp.tanh(c2)

        # Packed-sequence masking: forward lanes valid while t < len,
        # backward lanes valid while (T-1-t) < len.
        step = jnp.where(is_fwd_lane, t, T - 1 - t)   # (B, 2H) int32
        m = step < lens_b
        h = jnp.where(m, h2, h)
        c = jnp.where(m, c2, c)
        s = s + jnp.where(m, h2, 0.0)                 # masked sum for avg pool
        return h, c, s

    # TODO(synk): for large T switch to a swept partial unroll (e.g. unroll=4)
    # to cap instruction count / vreg live-range pressure.
    _, _, s = lax.fori_loop(0, T, body, (zeros, zeros, zeros), unroll=True)

    # Length-masked average pooling (exact divide; off the serial path,
    # guarded against zero-length sequences).
    pooled = s / jnp.maximum(lens, 1).astype(jnp.float32)  # (B,2H)=[mean_f|mean_b]

    # pooled is already the [fwd | bwd] concat in lanes, so the MLP is just
    # two plain matmuls (no split / recombine needed).
    hidden = (jnp.dot(pooled, w1_ref[...], preferred_element_type=jnp.float32)
              + b1_ref[...])
    out_ref[...] = (jnp.dot(hidden, w2_ref[...],
                            preferred_element_type=jnp.float32) + b2_ref[...])


def _interleave_gates(mat_f, mat_b, H):
    """Pack per-direction 4H-wide gate matrices (torch order i,f,g,o) into an
    8H-wide matrix with columns ordered [i | f | o | g], each gate laid out as
    [fwd H | bwd H]."""
    order = (0, 1, 3, 2)          # i, f, o, g
    cols = []
    for k in order:
        cols.append(mat_f[..., k * H:(k + 1) * H])
        cols.append(mat_b[..., k * H:(k + 1) * H])
    return jnp.concatenate(cols, axis=-1)


def bilstm_classifier(x_ids, x_len, emb_table, params):
    """Full forward pass.  Embedding gather is glue (plain JAX); everything
    else runs inside one Pallas kernel."""
    B, T = x_ids.shape
    D = emb_table.shape[1]
    H = params["whh_f"].shape[0]
    n_class = params["w2"].shape[1]

    # TODO(synk): embedding lookup (gather) stays in JAX; a DMA-gather kernel
    # is not worthwhile for this table size.
    x_emb = jnp.take(emb_table, x_ids, axis=0)                   # (B, T, D) f32
    emb_tm = jnp.transpose(x_emb, (1, 0, 2))                     # (T, B, D)
    emb_rev = emb_tm[::-1]                                       # time-reversed
    # Row-block t holds [x_t | x_{T-1-t}] so ONE prologue matmul projects both
    # directions and each loop step reads ONE contiguous row block.
    emb2 = jnp.concatenate([emb_tm, emb_rev], axis=-1).reshape(T * B, 2 * D)

    lens = x_len.reshape(B, 1).astype(jnp.int32)

    # Pack weights once (wrapper-side, one-time layout plumbing):
    #   wih_packed: (2D, 8H) block-structured — rows 0:D hit x_t and fill only
    #   forward gate columns; rows D:2D hit x_{T-1-t} and fill only backward
    #   gate columns.  whh_packed: (2H, 8H) block-diagonal in the same layout.
    zw = jnp.zeros_like(params["wih_f"])
    wih_packed = jnp.concatenate(
        [_interleave_gates(params["wih_f"], zw, H),
         _interleave_gates(zw, params["wih_b"], H)], axis=0)      # (2D, 8H)
    bih_packed = _interleave_gates(params["b_f"], params["b_b"], H)  # (1, 8H)
    zh = jnp.zeros_like(params["whh_f"])
    whh_packed = jnp.concatenate(
        [_interleave_gates(params["whh_f"], zh, H),
         _interleave_gates(zh, params["whh_b"], H)], axis=0)      # (2H, 8H)

    kernel = functools.partial(bilstm_classifier_kernel, T=T, B=B, H=H)
    vmem = pl.BlockSpec(memory_space=pltpu.MemorySpace.VMEM)

    # TODO(synk): for large T*B*D stream the embedding/gates over a T-chunk
    # grid axis ("arbitrary", LSTM carries in persistent VMEM scratch) sized
    # against v7x's 64 MiB VMEM; for large B add a "parallel" batch grid axis
    # so v7x's second TensorCore is used.
    return pl.pallas_call(
        kernel,
        out_shape=jax.ShapeDtypeStruct((B, n_class), jnp.float32),
        in_specs=[vmem] * 9,
        out_specs=vmem,
        scratch_shapes=[pltpu.VMEM((T * B, 8 * H), jnp.float32)],
        compiler_params=pltpu.CompilerParams(
            vmem_limit_bytes=32 * 1024 * 1024),
    )(emb2, lens, wih_packed, bih_packed, whh_packed,
      params["w1"], params["b1"], params["w2"], params["b2"])


def reference_forward(x_ids, x_len, emb_table, params):
    """Pure-JAX f32 reference with identical semantics (packed BiLSTM +
    masked mean pooling + two Linear layers)."""
    B, T = x_ids.shape
    H = params["whh_f"].shape[0]
    emb = jnp.take(emb_table, x_ids, axis=0)                     # (B, T, D)
    lens = x_len.reshape(B, 1)

    def run_dir(wih, whh, b, reverse):
        proj = jnp.einsum("btd,dg->tbg", emb, wih,
                          preferred_element_type=jnp.float32) + b  # (T, B, 4H)

        def step(carry, t):
            h, c, s = carry
            tt = T - 1 - t if reverse else t
            g = proj[tt] + jnp.dot(h, whh, preferred_element_type=jnp.float32)
            i = jax.nn.sigmoid(g[:, 0 * H:1 * H])
            f = jax.nn.sigmoid(g[:, 1 * H:2 * H])
            gg = jnp.tanh(g[:, 2 * H:3 * H])
            o = jax.nn.sigmoid(g[:, 3 * H:4 * H])
            c2 = f * c + i * gg
            h2 = o * jnp.tanh(c2)
            m = tt < lens
            h = jnp.where(m, h2, h)
            c = jnp.where(m, c2, c)
            s = s + jnp.where(m, h2, 0.0)
            return (h, c, s), None

        init = tuple(jnp.zeros((B, H), jnp.float32) for _ in range(3))
        (_, _, s), _ = lax.scan(step, init, jnp.arange(T))
        return s

    s_f = run_dir(params["wih_f"], params["whh_f"], params["b_f"], False)
    s_b = run_dir(params["wih_b"], params["whh_b"], params["b_b"], True)
    sentence = (jnp.concatenate([s_f, s_b], axis=-1)
                / jnp.maximum(lens, 1).astype(jnp.float32))
    hidden = sentence @ params["w1"] + params["b1"]
    return hidden @ params["w2"] + params["b2"]


if __name__ == "__main__":
    # Small, deterministic problem sizes implied by the module's forward.
    VOCAB = 50
    WORD_DIM = 32    # word_dim
    LSTM_DIM = 32    # lstm_dim (per direction)
    MLP_DIM = 32     # mlp_dim
    N_CLASS = 8      # n_class
    B, T = 8, 8      # batch, sequence length

    key = jax.random.PRNGKey(0)
    ks = jax.random.split(key, 16)
    sc = 0.1

    emb_table = sc * jax.random.normal(ks[0], (VOCAB, WORD_DIM), jnp.float32)
    params = {
        # forward-direction LSTM (stored as (in, 4H) so kernel does x @ W)
        "wih_f": sc * jax.random.normal(ks[1], (WORD_DIM, 4 * LSTM_DIM), jnp.float32),
        "whh_f": sc * jax.random.normal(ks[2], (LSTM_DIM, 4 * LSTM_DIM), jnp.float32),
        "b_f":   sc * jax.random.normal(ks[3], (1, 4 * LSTM_DIM), jnp.float32),
        # backward-direction LSTM
        "wih_b": sc * jax.random.normal(ks[4], (WORD_DIM, 4 * LSTM_DIM), jnp.float32),
        "whh_b": sc * jax.random.normal(ks[5], (LSTM_DIM, 4 * LSTM_DIM), jnp.float32),
        "b_b":   sc * jax.random.normal(ks[6], (1, 4 * LSTM_DIM), jnp.float32),
        # mlp_layer: Linear(2*lstm_dim, mlp_dim)
        "w1":    sc * jax.random.normal(ks[7], (2 * LSTM_DIM, MLP_DIM), jnp.float32),
        "b1":    sc * jax.random.normal(ks[8], (1, MLP_DIM), jnp.float32),
        # classify_layer: Linear(mlp_dim, n_class)
        "w2":    sc * jax.random.normal(ks[9], (MLP_DIM, N_CLASS), jnp.float32),
        "b2":    sc * jax.random.normal(ks[10], (1, N_CLASS), jnp.float32),
    }

    x_ids = jax.random.randint(ks[11], (B, T), 1, VOCAB, dtype=jnp.int32)
    x_len = jnp.array([8, 5, 3, 8, 1, 6, 7, 4], dtype=jnp.int32)

    logits = bilstm_classifier(x_ids, x_len, emb_table, params)
    logits = jax.block_until_ready(logits)

    ref = reference_forward(x_ids, x_len, emb_table, params)
    ref = jax.block_until_ready(ref)
    np.testing.assert_allclose(np.asarray(logits), np.asarray(ref),
                               rtol=2e-3, atol=2e-3)

    assert logits.shape == (B, N_CLASS)
    print("KERNEL_OK")
</pallas_src>

<mosaic_0001>
module attributes {stable_mosaic.version = 11 : i64} {
  func.func @bilstm_classifier_kernel(%arg0: memref<64x64xf32, #tpu.memory_space<vmem>>, %arg1: memref<8x1xi32, #tpu.memory_space<vmem>>, %arg2: memref<64x256xf32, #tpu.memory_space<vmem>>, %arg3: memref<1x256xf32, #tpu.memory_space<vmem>>, %arg4: memref<64x256xf32, #tpu.memory_space<vmem>>, %arg5: memref<64x32xf32, #tpu.memory_space<vmem>>, %arg6: memref<1x32xf32, #tpu.memory_space<vmem>>, %arg7: memref<32x8xf32, #tpu.memory_space<vmem>>, %arg8: memref<1x8xf32, #tpu.memory_space<vmem>>, %arg9: memref<8x8xf32, #tpu.memory_space<vmem>>, %arg10: memref<64x256xf32, #tpu.memory_space<vmem>>) attributes {dimension_semantics = [], scalar_prefetch = 0 : i64, scratch_operands = 1 : i64, tpu.core_type = #tpu.core_type<tc>} {
    %c0 = arith.constant 0 : index
    %c0_0 = arith.constant 0 : index
    %0 = vector.load %arg0[%c0, %c0_0] : memref<64x64xf32, #tpu.memory_space<vmem>>, vector<64x64xf32>
    %c0_1 = arith.constant 0 : index
    %c0_2 = arith.constant 0 : index
    %1 = vector.load %arg2[%c0_1, %c0_2] : memref<64x256xf32, #tpu.memory_space<vmem>>, vector<64x256xf32>
    %cst = arith.constant dense<0.000000e+00> : vector<64x256xf32>
    %2 = tpu.matmul %0, %1, %cst {dimension_numbers = #tpu.dot_dimension_numbers<[1], [0], [0], [1], [0, 0, 1, 1], [], []>} : vector<64x64xf32>, vector<64x256xf32>, vector<64x256xf32> -> vector<64x256xf32>
    %c0_3 = arith.constant 0 : index
    %c0_4 = arith.constant 0 : index
    %3 = vector.load %arg3[%c0_3, %c0_4] : memref<1x256xf32, #tpu.memory_space<vmem>>, vector<1x256xf32>
    %4 = vector.broadcast %3 : vector<1x256xf32> to vector<64x256xf32>
    %5 = arith.addf %2, %4 : vector<64x256xf32>
    %c0_5 = arith.constant 0 : index
    %c0_6 = arith.constant 0 : index
    %6 = vector.load %arg10[%c0_5, %c0_6] : memref<64x256xf32, #tpu.memory_space<vmem>>, vector<64x256xf32>
    tpu.vector_store %arg10[%c0_5, %c0_6], %5 {strides = array<i32>} : memref<64x256xf32, #tpu.memory_space<vmem>>, vector<64x256xf32>,
    %c0_7 = arith.constant 0 : index
    %c0_8 = arith.constant 0 : index
    %7 = vector.load %arg4[%c0_7, %c0_8] : memref<64x256xf32, #tpu.memory_space<vmem>>, vector<64x256xf32>
    %c0_9 = arith.constant 0 : index
    %c0_10 = arith.constant 0 : index
    %8 = vector.load %arg1[%c0_9, %c0_10] : memref<8x1xi32, #tpu.memory_space<vmem>>, vector<8x1xi32>
    %9 = vector.shape_cast %8 : vector<8x1xi32> to vector<8x1xi32>
    %10 = vector.broadcast %9 : vector<8x1xi32> to vector<8x64xi32>
    %11 = tpu.iota {dimensions = array<i32: 1>} : vector<8x64xi32>
    %c32_i32 = arith.constant 32 : i32
    %12 = vector.broadcast %c32_i32 : i32 to vector<8x64xi32>
    %13 = arith.cmpi slt, %11, %12 : vector<8x64xi32>
    %cst_11 = arith.constant 0.000000e+00 : f32
    %14 = vector.broadcast %cst_11 : f32 to vector<8x64xf32>
    %c0_i32 = arith.constant 0 : i32
    %c8_i32 = arith.constant 8 : i32
    %15 = arith.muli %c0_i32, %c8_i32 : i32
    %16 = tpu.assume_multiple %15, 8 : i32
    %17 = arith.index_cast %16 : i32 to index
    %c0_12 = arith.constant 0 : index
    %18 = vector.load %arg10[%17, %c0_12] : memref<64x256xf32, #tpu.memory_space<vmem>>, vector<8x256xf32>
    %cst_13 = arith.constant dense<0.000000e+00> : vector<8x256xf32>
    %19 = tpu.matmul %14, %7, %cst_13 {dimension_numbers = #tpu.dot_dimension_numbers<[1], [0], [0], [1], [0, 0, 1, 1], [], []>} : vector<8x64xf32>, vector<64x256xf32>, vector<8x256xf32> -> vector<8x256xf32>
    %20 = arith.addf %18, %19 : vector<8x256xf32>
    %21 = vector.extract_strided_slice %20 {offsets = [0, 0], sizes = [8, 192], strides = [1, 1]} : vector<8x256xf32> to vector<8x192xf32>
    %22 = arith.negf %21 : vector<8x192xf32>
    %23 = math.exp %22 : vector<8x192xf32>
    %cst_14 = arith.constant 1.000000e+00 : f32
    %24 = vector.broadcast %cst_14 : f32 to vector<8x192xf32>
    %25 = arith.addf %24, %23 : vector<8x192xf32>
    %26 = arith.divf %24, %25 : vector<8x192xf32>
    %27 = vector.extract_strided_slice %20 {offsets = [0, 192], sizes = [8, 64], strides = [1, 1]} : vector<8x256xf32> to vector<8x64xf32>
    %28 = math.tanh %27 : vector<8x64xf32>
    %29 = vector.extract_strided_slice %26 {offsets = [0, 0], sizes = [8, 64], strides = [1, 1]} : vector<8x192xf32> to vector<8x64xf32>
    %30 = vector.extract_strided_slice %26 {offsets = [0, 64], sizes = [8, 64], strides = [1, 1]} : vector<8x192xf32> to vector<8x64xf32>
    %31 = vector.extract_strided_slice %26 {offsets = [0, 128], sizes = [8, 64], strides = [1, 1]} : vector<8x192xf32> to vector<8x64xf32>
    %32 = arith.mulf %30, %14 : vector<8x64xf32>
    %33 = arith.mulf %29, %28 : vector<8x64xf32>
    %34 = arith.addf %32, %33 : vector<8x64xf32>
    %35 = math.tanh %34 : vector<8x64xf32>
    %36 = arith.mulf %31, %35 : vector<8x64xf32>
    %c7_i32 = arith.constant 7 : i32
    %37 = arith.subi %c7_i32, %c0_i32 : i32
    %38 = vector.broadcast %c0_i32 : i32 to vector<8x64xi32>
    %39 = vector.broadcast %37 : i32 to vector<8x64xi32>
    %40 = arith.select %13, %38, %39 : vector<8x64xi1>, vector<8x64xi32>
    %41 = arith.cmpi slt, %40, %10 : vector<8x64xi32>
    %42 = arith.select %41, %36, %14 : vector<8x64xi1>, vector<8x64xf32>
    %43 = arith.select %41, %34, %14 : vector<8x64xi1>, vector<8x64xf32>
    %cst_15 = arith.constant 0.000000e+00 : f32
    %44 = vector.broadcast %cst_15 : f32 to vector<8x64xf32>
    %45 = arith.select %41, %36, %44 : vector<8x64xi1>, vector<8x64xf32>
    %46 = arith.addf %14, %45 : vector<8x64xf32>
    %c1_i32 = arith.constant 1 : i32
    %c8_i32_16 = arith.constant 8 : i32
    %47 = arith.muli %c1_i32, %c8_i32_16 : i32
    %48 = tpu.assume_multiple %47, 8 : i32
    %49 = arith.index_cast %48 : i32 to index
    %c0_17 = arith.constant 0 : index
    %50 = vector.load %arg10[%49, %c0_17] : memref<64x256xf32, #tpu.memory_space<vmem>>, vector<8x256xf32>
    %cst_18 = arith.constant dense<0.000000e+00> : vector<8x256xf32>
    %51 = tpu.matmul %42, %7, %cst_18 {dimension_numbers = #tpu.dot_dimension_numbers<[1], [0], [0], [1], [0, 0, 1, 1], [], []>} : vector<8x64xf32>, vector<64x256xf32>, vector<8x256xf32> -> vector<8x256xf32>
    %52 = arith.addf %50, %51 : vector<8x256xf32>
    %53 = vector.extract_strided_slice %52 {offsets = [0, 0], sizes = [8, 192], strides = [1, 1]} : vector<8x256xf32> to vector<8x192xf32>
    %54 = arith.negf %53 : vector<8x192xf32>
    %55 = math.exp %54 : vector<8x192xf32>
    %cst_19 = arith.constant 1.000000e+00 : f32
    %56 = vector.broadcast %cst_19 : f32 to vector<8x192xf32>
    %57 = arith.addf %56, %55 : vector<8x192xf32>
    %58 = arith.divf %56, %57 : vector<8x192xf32>
    %59 = vector.extract_strided_slice %52 {offsets = [0, 192], sizes = [8, 64], strides = [1, 1]} : vector<8x256xf32> to vector<8x64xf32>
    %60 = math.tanh %59 : vector<8x64xf32>
    %61 = vector.extract_strided_slice %58 {offsets = [0, 0], sizes = [8, 64], strides = [1, 1]} : vector<8x192xf32> to vector<8x64xf32>
    %62 = vector.extract_strided_slice %58 {offsets = [0, 64], sizes = [8, 64], strides = [1, 1]} : vector<8x192xf32> to vector<8x64xf32>
    %63 = vector.extract_strided_slice %58 {offsets = [0, 128], sizes = [8, 64], strides = [1, 1]} : vector<8x192xf32> to vector<8x64xf32>
    %64 = arith.mulf %62, %43 : vector<8x64xf32>
    %65 = arith.mulf %61, %60 : vector<8x64xf32>
    %66 = arith.addf %64, %65 : vector<8x64xf32>
    %67 = math.tanh %66 : vector<8x64xf32>
    %68 = arith.mulf %63, %67 : vector<8x64xf32>
    %c7_i32_20 = arith.constant 7 : i32
    %69 = arith.subi %c7_i32_20, %c1_i32 : i32
    %70 = vector.broadcast %c1_i32 : i32 to vector<8x64xi32>
    %71 = vector.broadcast %69 : i32 to vector<8x64xi32>
    %72 = arith.select %13, %70, %71 : vector<8x64xi1>, vector<8x64xi32>
    %73 = arith.cmpi slt, %72, %10 : vector<8x64xi32>
    %74 = arith.select %73, %68, %42 : vector<8x64xi1>, vector<8x64xf32>
    %75 = arith.select %73, %66, %43 : vector<8x64xi1>, vector<8x64xf32>
    %cst_21 = arith.constant 0.000000e+00 : f32
    %76 = vector.broadcast %cst_21 : f32 to vector<8x64xf32>
    %77 = arith.select %73, %68, %76 : vector<8x64xi1>, vector<8x64xf32>
    %78 = arith.addf %46, %77 : vector<8x64xf32>
    %c2_i32 = arith.constant 2 : i32
    %c8_i32_22 = arith.constant 8 : i32
    %79 = arith.muli %c2_i32, %c8_i32_22 : i32
    %80 = tpu.assume_multiple %79, 8 : i32
    %81 = arith.index_cast %80 : i32 to index
    %c0_23 = arith.constant 0 : index
    %82 = vector.load %arg10[%81, %c0_23] : memref<64x256xf32, #tpu.memory_space<vmem>>, vector<8x256xf32>
    %cst_24 = arith.constant dense<0.000000e+00> : vector<8x256xf32>
    %83 = tpu.matmul %74, %7, %cst_24 {dimension_numbers = #tpu.dot_dimension_numbers<[1], [0], [0], [1], [0, 0, 1, 1], [], []>} : vector<8x64xf32>, vector<64x256xf32>, vector<8x256xf32> -> vector<8x256xf32>
    %84 = arith.addf %82, %83 : vector<8x256xf32>
    %85 = vector.extract_strided_slice %84 {offsets = [0, 0], sizes = [8, 192], strides = [1, 1]} : vector<8x256xf32> to vector<8x192xf32>
    %86 = arith.negf %85 : vector<8x192xf32>
    %87 = math.exp %86 : vector<8x192xf32>
    %cst_25 = arith.constant 1.000000e+00 : f32
    %88 = vector.broadcast %cst_25 : f32 to vector<8x192xf32>
    %89 = arith.addf %88, %87 : vector<8x192xf32>
    %90 = arith.divf %88, %89 : vector<8x192xf32>
    %91 = vector.extract_strided_slice %84 {offsets = [0, 192], sizes = [8, 64], strides = [1, 1]} : vector<8x256xf32> to vector<8x64xf32>
    %92 = math.tanh %91 : vector<8x64xf32>
    %93 = vector.extract_strided_slice %90 {offsets = [0, 0], sizes = [8, 64], strides = [1, 1]} : vector<8x192xf32> to vector<8x64xf32>
    %94 = vector.extract_strided_slice %90 {offsets = [0, 64], sizes = [8, 64], strides = [1, 1]} : vector<8x192xf32> to vector<8x64xf32>
    %95 = vector.extract_strided_slice %90 {offsets = [0, 128], sizes = [8, 64], strides = [1, 1]} : vector<8x192xf32> to vector<8x64xf32>
    %96 = arith.mulf %94, %75 : vector<8x64xf32>
    %97 = arith.mulf %93, %92 : vector<8x64xf32>
    %98 = arith.addf %96, %97 : vector<8x64xf32>
    %99 = math.tanh %98 : vector<8x64xf32>
    %100 = arith.mulf %95, %99 : vector<8x64xf32>
    %c7_i32_26 = arith.constant 7 : i32
    %101 = arith.subi %c7_i32_26, %c2_i32 : i32
    %102 = vector.broadcast %c2_i32 : i32 to vector<8x64xi32>
    %103 = vector.broadcast %101 : i32 to vector<8x64xi32>
    %104 = arith.select %13, %102, %103 : vector<8x64xi1>, vector<8x64xi32>
    %105 = arith.cmpi slt, %104, %10 : vector<8x64xi32>
    %106 = arith.select %105, %100, %74 : vector<8x64xi1>, vector<8x64xf32>
    %107 = arith.select %105, %98, %75 : vector<8x64xi1>, vector<8x64xf32>
    %cst_27 = arith.constant 0.000000e+00 : f32
    %108 = vector.broadcast %cst_27 : f32 to vector<8x64xf32>
    %109 = arith.select %105, %100, %108 : vector<8x64xi1>, vector<8x64xf32>
    %110 = arith.addf %78, %109 : vector<8x64xf32>
    %c3_i32 = arith.constant 3 : i32
    %c8_i32_28 = arith.constant 8 : i32
    %111 = arith.muli %c3_i32, %c8_i32_28 : i32
    %112 = tpu.assume_multiple %111, 8 : i32
    %113 = arith.index_cast %112 : i32 to index
    %c0_29 = arith.constant 0 : index
    %114 = vector.load %arg10[%113, %c0_29] : memref<64x256xf32, #tpu.memory_space<vmem>>, vector<8x256xf32>
    %cst_30 = arith.constant dense<0.000000e+00> : vector<8x256xf32>
    %115 = tpu.matmul %106, %7, %cst_30 {dimension_numbers = #tpu.dot_dimension_numbers<[1], [0], [0], [1], [0, 0, 1, 1], [], []>} : vector<8x64xf32>, vector<64x256xf32>, vector<8x256xf32> -> vector<8x256xf32>
    %116 = arith.addf %114, %115 : vector<8x256xf32>
    %117 = vector.extract_strided_slice %116 {offsets = [0, 0], sizes = [8, 192], strides = [1, 1]} : vector<8x256xf32> to vector<8x192xf32>
    %118 = arith.negf %117 : vector<8x192xf32>
    %119 = math.exp %118 : vector<8x192xf32>
    %cst_31 = arith.constant 1.000000e+00 : f32
    %120 = vector.broadcast %cst_31 : f32 to vector<8x192xf32>
    %121 = arith.addf %120, %119 : vector<8x192xf32>
    %122 = arith.divf %120, %121 : vector<8x192xf32>
    %123 = vector.extract_strided_slice %116 {offsets = [0, 192], sizes = [8, 64], strides = [1, 1]} : vector<8x256xf32> to vector<8x64xf32>
    %124 = math.tanh %123 : vector<8x64xf32>
    %125 = vector.extract_strided_slice %122 {offsets = [0, 0], sizes = [8, 64], strides = [1, 1]} : vector<8x192xf32> to vector<8x64xf32>
    %126 = vector.extract_strided_slice %122 {offsets = [0, 64], sizes = [8, 64], strides = [1, 1]} : vector<8x192xf32> to vector<8x64xf32>
    %127 = vector.extract_strided_slice %122 {offsets = [0, 128], sizes = [8, 64], strides = [1, 1]} : vector<8x192xf32> to vector<8x64xf32>
    %128 = arith.mulf %126, %107 : vector<8x64xf32>
    %129 = arith.mulf %125, %124 : vector<8x64xf32>
    %130 = arith.addf %128, %129 : vector<8x64xf32>
    %131 = math.tanh %130 : vector<8x64xf32>
    %132 = arith.mulf %127, %131 : vector<8x64xf32>
    %c7_i32_32 = arith.constant 7 : i32
    %133 = arith.subi %c7_i32_32, %c3_i32 : i32
    %134 = vector.broadcast %c3_i32 : i32 to vector<8x64xi32>
    %135 = vector.broadcast %133 : i32 to vector<8x64xi32>
    %136 = arith.select %13, %134, %135 : vector<8x64xi1>, vector<8x64xi32>
    %137 = arith.cmpi slt, %136, %10 : vector<8x64xi32>
    %138 = arith.select %137, %132, %106 : vector<8x64xi1>, vector<8x64xf32>
    %139 = arith.select %137, %130, %107 : vector<8x64xi1>, vector<8x64xf32>
    %cst_33 = arith.constant 0.000000e+00 : f32
    %140 = vector.broadcast %cst_33 : f32 to vector<8x64xf32>
    %141 = arith.select %137, %132, %140 : vector<8x64xi1>, vector<8x64xf32>
    %142 = arith.addf %110, %141 : vector<8x64xf32>
    %c4_i32 = arith.constant 4 : i32
    %c8_i32_34 = arith.constant 8 : i32
    %143 = arith.muli %c4_i32, %c8_i32_34 : i32
    %144 = tpu.assume_multiple %143, 8 : i32
    %145 = arith.index_cast %144 : i32 to index
    %c0_35 = arith.constant 0 : index
    %146 = vector.load %arg10[%145, %c0_35] : memref<64x256xf32, #tpu.memory_space<vmem>>, vector<8x256xf32>
    %cst_36 = arith.constant dense<0.000000e+00> : vector<8x256xf32>
    %147 = tpu.matmul %138, %7, %cst_36 {dimension_numbers = #tpu.dot_dimension_numbers<[1], [0], [0], [1], [0, 0, 1, 1], [], []>} : vector<8x64xf32>, vector<64x256xf32>, vector<8x256xf32> -> vector<8x256xf32>
    %148 = arith.addf %146, %147 : vector<8x256xf32>
    %149 = vector.extract_strided_slice %148 {offsets = [0, 0], sizes = [8, 192], strides = [1, 1]} : vector<8x256xf32> to vector<8x192xf32>
    %150 = arith.negf %149 : vector<8x192xf32>
    %151 = math.exp %150 : vector<8x192xf32>
    %cst_37 = arith.constant 1.000000e+00 : f32
    %152 = vector.broadcast %cst_37 : f32 to vector<8x192xf32>
    %153 = arith.addf %152, %151 : vector<8x192xf32>
    %154 = arith.divf %152, %153 : vector<8x192xf32>
    %155 = vector.extract_strided_slice %148 {offsets = [0, 192], sizes = [8, 64], strides = [1, 1]} : vector<8x256xf32> to vector<8x64xf32>
    %156 = math.tanh %155 : vector<8x64xf32>
    %157 = vector.extract_strided_slice %154 {offsets = [0, 0], sizes = [8, 64], strides = [1, 1]} : vector<8x192xf32> to vector<8x64xf32>
    %158 = vector.extract_strided_slice %154 {offsets = [0, 64], sizes = [8, 64], strides = [1, 1]} : vector<8x192xf32> to vector<8x64xf32>
    %159 = vector.extract_strided_slice %154 {offsets = [0, 128], sizes = [8, 64], strides = [1, 1]} : vector<8x192xf32> to vector<8x64xf32>
    %160 = arith.mulf %158, %139 : vector<8x64xf32>
    %161 = arith.mulf %157, %156 : vector<8x64xf32>
    %162 = arith.addf %160, %161 : vector<8x64xf32>
    %163 = math.tanh %162 : vector<8x64xf32>
    %164 = arith.mulf %159, %163 : vector<8x64xf32>
    %c7_i32_38 = arith.constant 7 : i32
    %165 = arith.subi %c7_i32_38, %c4_i32 : i32
    %166 = vector.broadcast %c4_i32 : i32 to vector<8x64xi32>
    %167 = vector.broadcast %165 : i32 to vector<8x64xi32>
    %168 = arith.select %13, %166, %167 : vector<8x64xi1>, vector<8x64xi32>
    %169 = arith.cmpi slt, %168, %10 : vector<8x64xi32>
    %170 = arith.select %169, %164, %138 : vector<8x64xi1>, vector<8x64xf32>
    %171 = arith.select %169, %162, %139 : vector<8x64xi1>, vector<8x64xf32>
    %cst_39 = arith.constant 0.000000e+00 : f32
    %172 = vector.broadcast %cst_39 : f32 to vector<8x64xf32>
    %173 = arith.select %169, %164, %172 : vector<8x64xi1>, vector<8x64xf32>
    %174 = arith.addf %142, %173 : vector<8x64xf32>
    %c5_i32 = arith.constant 5 : i32
    %c8_i32_40 = arith.constant 8 : i32
    %175 = arith.muli %c5_i32, %c8_i32_40 : i32
    %176 = tpu.assume_multiple %175, 8 : i32
    %177 = arith.index_cast %176 : i32 to index
    %c0_41 = arith.constant 0 : index
    %178 = vector.load %arg10[%177, %c0_41] : memref<64x256xf32, #tpu.memory_space<vmem>>, vector<8x256xf32>
    %cst_42 = arith.constant dense<0.000000e+00> : vector<8x256xf32>
    %179 = tpu.matmul %170, %7, %cst_42 {dimension_numbers = #tpu.dot_dimension_numbers<[1], [0], [0], [1], [0, 0, 1, 1], [], []>} : vector<8x64xf32>, vector<64x256xf32>, vector<8x256xf32> -> vector<8x256xf32>
    %180 = arith.addf %178, %179 : vector<8x256xf32>
    %181 = vector.extract_strided_slice %180 {offsets = [0, 0], sizes = [8, 192], strides = [1, 1]} : vector<8x256xf32> to vector<8x192xf32>
    %182 = arith.negf %181 : vector<8x192xf32>
    %183 = math.exp %182 : vector<8x192xf32>
    %cst_43 = arith.constant 1.000000e+00 : f32
    %184 = vector.broadcast %cst_43 : f32 to vector<8x192xf32>
    %185 = arith.addf %184, %183 : vector<8x192xf32>
    %186 = arith.divf %184, %185 : vector<8x192xf32>
    %187 = vector.extract_strided_slice %180 {offsets = [0, 192], sizes = [8, 64], strides = [1, 1]} : vector<8x256xf32> to vector<8x64xf32>
    %188 = math.tanh %187 : vector<8x64xf32>
    %189 = vector.extract_strided_slice %186 {offsets = [0, 0], sizes = [8, 64], strides = [1, 1]} : vector<8x192xf32> to vector<8x64xf32>
    %190 = vector.extract_strided_slice %186 {offsets = [0, 64], sizes = [8, 64], strides = [1, 1]} : vector<8x192xf32> to vector<8x64xf32>
    %191 = vector.extract_strided_slice %186 {offsets = [0, 128], sizes = [8, 64], strides = [1, 1]} : vector<8x192xf32> to vector<8x64xf32>
    %192 = arith.mulf %190, %171 : vector<8x64xf32>
    %193 = arith.mulf %189, %188 : vector<8x64xf32>
    %194 = arith.addf %192, %193 : vector<8x64xf32>
    %195 = math.tanh %194 : vector<8x64xf32>
    %196 = arith.mulf %191, %195 : vector<8x64xf32>
    %c7_i32_44 = arith.constant 7 : i32
    %197 = arith.subi %c7_i32_44, %c5_i32 : i32
    %198 = vector.broadcast %c5_i32 : i32 to vector<8x64xi32>
    %199 = vector.broadcast %197 : i32 to vector<8x64xi32>
    %200 = arith.select %13, %198, %199 : vector<8x64xi1>, vector<8x64xi32>
    %201 = arith.cmpi slt, %200, %10 : vector<8x64xi32>
    %202 = arith.select %201, %196, %170 : vector<8x64xi1>, vector<8x64xf32>
    %203 = arith.select %201, %194, %171 : vector<8x64xi1>, vector<8x64xf32>
    %cst_45 = arith.constant 0.000000e+00 : f32
    %204 = vector.broadcast %cst_45 : f32 to vector<8x64xf32>
    %205 = arith.select %201, %196, %204 : vector<8x64xi1>, vector<8x64xf32>
    %206 = arith.addf %174, %205 : vector<8x64xf32>
    %c6_i32 = arith.constant 6 : i32
    %c8_i32_46 = arith.constant 8 : i32
    %207 = arith.muli %c6_i32, %c8_i32_46 : i32
    %208 = tpu.assume_multiple %207, 8 : i32
    %209 = arith.index_cast %208 : i32 to index
    %c0_47 = arith.constant 0 : index
    %210 = vector.load %arg10[%209, %c0_47] : memref<64x256xf32, #tpu.memory_space<vmem>>, vector<8x256xf32>
    %cst_48 = arith.constant dense<0.000000e+00> : vector<8x256xf32>
    %211 = tpu.matmul %202, %7, %cst_48 {dimension_numbers = #tpu.dot_dimension_numbers<[1], [0], [0], [1], [0, 0, 1, 1], [], []>} : vector<8x64xf32>, vector<64x256xf32>, vector<8x256xf32> -> vector<8x256xf32>
    %212 = arith.addf %210, %211 : vector<8x256xf32>
    %213 = vector.extract_strided_slice %212 {offsets = [0, 0], sizes = [8, 192], strides = [1, 1]} : vector<8x256xf32> to vector<8x192xf32>
    %214 = arith.negf %213 : vector<8x192xf32>
    %215 = math.exp %214 : vector<8x192xf32>
    %cst_49 = arith.constant 1.000000e+00 : f32
    %216 = vector.broadcast %cst_49 : f32 to vector<8x192xf32>
    %217 = arith.addf %216, %215 : vector<8x192xf32>
    %218 = arith.divf %216, %217 : vector<8x192xf32>
    %219 = vector.extract_strided_slice %212 {offsets = [0, 192], sizes = [8, 64], strides = [1, 1]} : vector<8x256xf32> to vector<8x64xf32>
    %220 = math.tanh %219 : vector<8x64xf32>
    %221 = vector.extract_strided_slice %218 {offsets = [0, 0], sizes = [8, 64], strides = [1, 1]} : vector<8x192xf32> to vector<8x64xf32>
    %222 = vector.extract_strided_slice %218 {offsets = [0, 64], sizes = [8, 64], strides = [1, 1]} : vector<8x192xf32> to vector<8x64xf32>
    %223 = vector.extract_strided_slice %218 {offsets = [0, 128], sizes = [8, 64], strides = [1, 1]} : vector<8x192xf32> to vector<8x64xf32>
    %224 = arith.mulf %222, %203 : vector<8x64xf32>
    %225 = arith.mulf %221, %220 : vector<8x64xf32>
    %226 = arith.addf %224, %225 : vector<8x64xf32>
    %227 = math.tanh %226 : vector<8x64xf32>
    %228 = arith.mulf %223, %227 : vector<8x64xf32>
    %c7_i32_50 = arith.constant 7 : i32
    %229 = arith.subi %c7_i32_50, %c6_i32 : i32
    %230 = vector.broadcast %c6_i32 : i32 to vector<8x64xi32>
    %231 = vector.broadcast %229 : i32 to vector<8x64xi32>
    %232 = arith.select %13, %230, %231 : vector<8x64xi1>, vector<8x64xi32>
    %233 = arith.cmpi slt, %232, %10 : vector<8x64xi32>
    %234 = arith.select %233, %228, %202 : vector<8x64xi1>, vector<8x64xf32>
    %235 = arith.select %233, %226, %203 : vector<8x64xi1>, vector<8x64xf32>
    %cst_51 = arith.constant 0.000000e+00 : f32
    %236 = vector.broadcast %cst_51 : f32 to vector<8x64xf32>
    %237 = arith.select %233, %228, %236 : vector<8x64xi1>, vector<8x64xf32>
    %238 = arith.addf %206, %237 : vector<8x64xf32>
    %c7_i32_52 = arith.constant 7 : i32
    %c8_i32_53 = arith.constant 8 : i32
    %239 = arith.muli %c7_i32_52, %c8_i32_53 : i32
    %240 = tpu.assume_multiple %239, 8 : i32
    %241 = arith.index_cast %240 : i32 to index
    %c0_54 = arith.constant 0 : index
    %242 = vector.load %arg10[%241, %c0_54] : memref<64x256xf32, #tpu.memory_space<vmem>>, vector<8x256xf32>
    %cst_55 = arith.constant dense<0.000000e+00> : vector<8x256xf32>
    %243 = tpu.matmul %234, %7, %cst_55 {dimension_numbers = #tpu.dot_dimension_numbers<[1], [0], [0], [1], [0, 0, 1, 1], [], []>} : vector<8x64xf32>, vector<64x256xf32>, vector<8x256xf32> -> vector<8x256xf32>
    %244 = arith.addf %242, %243 : vector<8x256xf32>
    %245 = vector.extract_strided_slice %244 {offsets = [0, 0], sizes = [8, 192], strides = [1, 1]} : vector<8x256xf32> to vector<8x192xf32>
    %246 = arith.negf %245 : vector<8x192xf32>
    %247 = math.exp %246 : vector<8x192xf32>
    %cst_56 = arith.constant 1.000000e+00 : f32
    %248 = vector.broadcast %cst_56 : f32 to vector<8x192xf32>
    %249 = arith.addf %248, %247 : vector<8x192xf32>
    %250 = arith.divf %248, %249 : vector<8x192xf32>
    %251 = vector.extract_strided_slice %244 {offsets = [0, 192], sizes = [8, 64], strides = [1, 1]} : vector<8x256xf32> to vector<8x64xf32>
    %252 = math.tanh %251 : vector<8x64xf32>
    %253 = vector.extract_strided_slice %250 {offsets = [0, 0], sizes = [8, 64], strides = [1, 1]} : vector<8x192xf32> to vector<8x64xf32>
    %254 = vector.extract_strided_slice %250 {offsets = [0, 64], sizes = [8, 64], strides = [1, 1]} : vector<8x192xf32> to vector<8x64xf32>
    %255 = vector.extract_strided_slice %250 {offsets = [0, 128], sizes = [8, 64], strides = [1, 1]} : vector<8x192xf32> to vector<8x64xf32>
    %256 = arith.mulf %254, %235 : vector<8x64xf32>
    %257 = arith.mulf %253, %252 : vector<8x64xf32>
    %258 = arith.addf %256, %257 : vector<8x64xf32>
    %259 = math.tanh %258 : vector<8x64xf32>
    %260 = arith.mulf %255, %259 : vector<8x64xf32>
    %c7_i32_57 = arith.constant 7 : i32
    %261 = arith.subi %c7_i32_57, %c7_i32_52 : i32
    %262 = vector.broadcast %c7_i32_52 : i32 to vector<8x64xi32>
    %263 = vector.broadcast %261 : i32 to vector<8x64xi32>
    %264 = arith.select %13, %262, %263 : vector<8x64xi1>, vector<8x64xi32>
    %265 = arith.cmpi slt, %264, %10 : vector<8x64xi32>
    %266 = arith.select %265, %260, %234 : vector<8x64xi1>, vector<8x64xf32>
    %267 = arith.select %265, %258, %235 : vector<8x64xi1>, vector<8x64xf32>
    %cst_58 = arith.constant 0.000000e+00 : f32
    %268 = vector.broadcast %cst_58 : f32 to vector<8x64xf32>
    %269 = arith.select %265, %260, %268 : vector<8x64xi1>, vector<8x64xf32>
    %270 = arith.addf %238, %269 : vector<8x64xf32>
    %c8_i32_59 = arith.constant 8 : i32
    %c1_i32_60 = arith.constant 1 : i32
    %271 = vector.broadcast %c1_i32_60 : i32 to vector<8x1xi32>
    %272 = arith.maxsi %8, %271 : vector<8x1xi32>
    %273 = arith.sitofp %272 : vector<8x1xi32> to vector<8x1xf32>
    %274 = vector.broadcast %273 : vector<8x1xf32> to vector<8x64xf32>
    %275 = arith.divf %270, %274 : vector<8x64xf32>
    %c0_61 = arith.constant 0 : index
    %c0_62 = arith.constant 0 : index
    %276 = vector.load %arg5[%c0_61, %c0_62] : memref<64x32xf32, #tpu.memory_space<vmem>>, vector<64x32xf32>
    %cst_63 = arith.constant dense<0.000000e+00> : vector<8x32xf32>
    %277 = tpu.matmul %275, %276, %cst_63 {dimension_numbers = #tpu.dot_dimension_numbers<[1], [0], [0], [1], [0, 0, 1, 1], [], []>} : vector<8x64xf32>, vector<64x32xf32>, vector<8x32xf32> -> vector<8x32xf32>
    %c0_64 = arith.constant 0 : index
    %c0_65 = arith.constant 0 : index
    %278 = vector.load %arg6[%c0_64, %c0_65] : memref<1x32xf32, #tpu.memory_space<vmem>>, vector<1x32xf32>
    %279 = vector.broadcast %278 : vector<1x32xf32> to vector<8x32xf32>
    %280 = arith.addf %277, %279 : vector<8x32xf32>
    %c0_66 = arith.constant 0 : index
    %c0_67 = arith.constant 0 : index
    %281 = vector.load %arg7[%c0_66, %c0_67] : memref<32x8xf32, #tpu.memory_space<vmem>>, vector<32x8xf32>
    %cst_68 = arith.constant dense<0.000000e+00> : vector<8x8xf32>
    %282 = tpu.matmul %280, %281, %cst_68 {dimension_numbers = #tpu.dot_dimension_numbers<[1], [0], [0], [1], [0, 0, 1, 1], [], []>} : vector<8x32xf32>, vector<32x8xf32>, vector<8x8xf32> -> vector<8x8xf32>
    %c0_69 = arith.constant 0 : index
    %c0_70 = arith.constant 0 : index
    %283 = vector.load %arg8[%c0_69, %c0_70] : memref<1x8xf32, #tpu.memory_space<vmem>>, vector<1x8xf32>
    %284 = vector.broadcast %283 : vector<1x8xf32> to vector<8x8xf32>
    %285 = arith.addf %282, %284 : vector<8x8xf32>
    %c0_71 = arith.constant 0 : index
    %c0_72 = arith.constant 0 : index
    %286 = vector.load %arg9[%c0_71, %c0_72] : memref<8x8xf32, #tpu.memory_space<vmem>>, vector<8x8xf32>
    tpu.vector_store %arg9[%c0_71, %c0_72], %285 {strides = array<i32>} : memref<8x8xf32, #tpu.memory_space<vmem>>, vector<8x8xf32>,
    return
  }
}

</mosaic_0001>

<llo_original>
// kernel: tpu_custom_call.1
$region0: #{tpu_custom_call.1}
  #allocation0 [shape = 'u32[]', space=smem, size = 0x4, offset = 0x4, fixed_abs, tag = 'smem constant byte address 0x4 - core index']
  #allocation1 [shape = 'u32[72,128]{1,0:T(1,128)}', space=vmem, size = 0x9000, scoped, tag = 'internal scratch']
  #allocation2 [shape = 'f32[64,256]{1,0:T(8,128)}', space=vmem, size = 0x10000, scoped, tag = 'scratch operand']
  %s0 = inlined_call_operand.vmem [shape: f32[64,64], index: 0, kind: input, shape index: {}]
  %s1 = inlined_call_operand.vmem [shape: s32[8,1], index: 1, kind: input, shape index: {}]
  %s2 = inlined_call_operand.hbm [shape: f32[64,256], index: 2, kind: input, shape index: {}]
  %s3 = inlined_call_operand.vmem [shape: f32[1,256], index: 3, kind: input, shape index: {}]
  %s4 = inlined_call_operand.hbm [shape: f32[64,256], index: 4, kind: input, shape index: {}]
  %s5 = inlined_call_operand.vmem [shape: f32[64,32], index: 5, kind: input, shape index: {}]
  %s6 = inlined_call_operand.vmem [shape: f32[1,32], index: 6, kind: input, shape index: {}]
  %s7 = inlined_call_operand.vmem [shape: f32[32,8], index: 7, kind: input, shape index: {}]
  %s8 = inlined_call_operand.vmem [shape: f32[1,8], index: 8, kind: input, shape index: {}]
  %s9 = inlined_call_operand.hbm [shape: f32[8,8], index: 9, kind: output, shape index: {}]
  %s10 = sld [smem:[#allocation0]]
  $region54: #{tpu_custom_call.1} parent=0
    _
  %s12 = ssub.s32 1, %s10
  %s13 = scalar_select 0, %s12, %s10
  $region1: #{tpu_custom_call.1} parent=0
    #allocation3 [shape = 'u8[65536]{0}', space=vmem, size = 0x10000, scoped, tag = 'input window, operand 2, single buffered']
    #allocation4 [shape = 's32[1]{0}', space=sflag, size = 0x4, scoped, tag = 'scoped memory for tpu_custom_call.1']
    #allocation5 [shape = 's32[1]{0}', space=sflag, size = 0x4, scoped, tag = 'scoped memory for tpu_custom_call.1']
    #allocation6 [shape = 'u8[65536]{0}', space=vmem, size = 0x10000, scoped, tag = 'input window, operand 4, single buffered']
    #allocation7 [shape = 's32[1]{0}', space=sflag, size = 0x4, scoped, tag = 'scoped memory for tpu_custom_call.1']
    #allocation8 [shape = 'u8[4096]{0}', space=vmem, size = 0x1000, scoped, tag = 'output window, operand 0, single buffered']
    %14 = vsyncpa [#allocation4], 0
    %15 = vsyncpa [#allocation7], 0
    %16 = vsyncpa [#allocation5], 0
    // Predicated region
    $region2: #{tpu_custom_call.1} parent=1 // pred_check
      _
    $region3: #{tpu_custom_call.1} parent=1 // pred_check_branch
      %18 = sbr.rel (0) target = $region5
    $region4: #{tpu_custom_call.1} parent=1 // pred_region
      _
    $region5: #{tpu_custom_call.1} parent=1 // pred_fallthru
      _
    // Predicated region
    $region6: #{tpu_custom_call.1} parent=1 // pred_check
      _
    $region7: #{tpu_custom_call.1} parent=1 // pred_check_branch
      %20 = sbr.rel (0) target = $region9
    $region8: #{tpu_custom_call.1} parent=1 // pred_region
      _
    $region9: #{tpu_custom_call.1} parent=1 // pred_fallthru
      _
    // Predicated region
    $region10: #{tpu_custom_call.1} parent=1 // pred_check
      _
    $region11: #{tpu_custom_call.1} parent=1 // pred_check_branch
      %22 = sbr.rel (0) target = $region13
    $region12: #{tpu_custom_call.1} parent=1 // pred_region
      %24 = vsyncadd [#allocation4], 0
      %s25 = sshll.u32 %s2, 4
      %s26 = int_to_ptr.hbm [resolvable:$true] %s25
      %s27 = sshll.u32 [#allocation3], 4
      %s28 = int_to_ptr.vmem [resolvable:$true] %s27
      %33 = dma.hbm_to_vmem [thread:$0]  %s26, 2048, %s28, [#allocation4], 256, 256, 16
    $region13: #{tpu_custom_call.1} parent=1 // pred_fallthru
      _
    // Predicated region
    $region14: #{tpu_custom_call.1} parent=1 // pred_check
      _
    $region15: #{tpu_custom_call.1} parent=1 // pred_check_branch
      %35 = sbr.rel (0) target = $region17
    $region16: #{tpu_custom_call.1} parent=1 // pred_region
      _
    $region17: #{tpu_custom_call.1} parent=1 // pred_fallthru
      _
    // Predicated region
    $region18: #{tpu_custom_call.1} parent=1 // pred_check
      _
    $region19: #{tpu_custom_call.1} parent=1 // pred_check_branch
      %37 = sbr.rel (0) target = $region21
    $region20: #{tpu_custom_call.1} parent=1 // pred_region
      %39 = vsyncadd [#allocation7], 0
      %s40 = sshll.u32 %s4, 4
      %s41 = int_to_ptr.hbm [resolvable:$true] %s40
      %s42 = sshll.u32 [#allocation6], 4
      %s43 = int_to_ptr.vmem [resolvable:$true] %s42
      %48 = dma.hbm_to_vmem [thread:$0]  %s41, 2048, %s43, [#allocation7], 256, 256, 16
    $region21: #{tpu_custom_call.1} parent=1 // pred_fallthru
      _
    // Predicated region
    $region22: #{tpu_custom_call.1} parent=1 // pred_check
      _
    $region23: #{tpu_custom_call.1} parent=1 // pred_check_branch
      %50 = sbr.rel (0) target = $region25
    $region24: #{tpu_custom_call.1} parent=1 // pred_region
      _
    $region25: #{tpu_custom_call.1} parent=1 // pred_fallthru
      _
    // Predicated region
    $region26: #{tpu_custom_call.1} parent=1 // pred_check
      _
    $region27: #{tpu_custom_call.1} parent=1 // pred_check_branch
      %52 = sbr.rel (0) target = $region29
    $region28: #{tpu_custom_call.1} parent=1 // pred_region
      _
    $region29: #{tpu_custom_call.1} parent=1 // pred_fallthru
      _
    // Predicated region
    $region30: #{tpu_custom_call.1} parent=1 // pred_check
      _
    $region31: #{tpu_custom_call.1} parent=1 // pred_check_branch
      %54 = sbr.rel (0) target = $region33
    $region32: #{tpu_custom_call.1} parent=1 // pred_region
      _
    $region33: #{tpu_custom_call.1} parent=1 // pred_fallthru
      _
    // Predicated region
    $region34: #{tpu_custom_call.1} parent=1 // pred_check
      _
    $region35: #{tpu_custom_call.1} parent=1 // pred_check_branch
      %56 = sbr.rel (0) target = $region37
    $region36: #{tpu_custom_call.1} parent=1 // pred_region
      _
    $region37: #{tpu_custom_call.1} parent=1 // pred_fallthru
      _
    // Predicated region
    $region38: #{tpu_custom_call.1} parent=1 // pred_check
      _
    $region39: #{tpu_custom_call.1} parent=1 // pred_check_branch
      %58 = sbr.rel (0) target = $region41
    $region40: #{tpu_custom_call.1} parent=1 // pred_region
      %60 = dma.done [#allocation4], 2048
    $region41: #{tpu_custom_call.1} parent=1 // pred_fallthru
      _
    // Predicated region
    $region42: #{tpu_custom_call.1} parent=1 // pred_check
      _
    $region43: #{tpu_custom_call.1} parent=1 // pred_check_branch
      %62 = sbr.rel (0) target = $region45
    $region44: #{tpu_custom_call.1} parent=1 // pred_region
      %64 = dma.done [#allocation7], 2048
    $region45: #{tpu_custom_call.1} parent=1 // pred_fallthru
      _
    %v65 = vld [vmem:[%s0] sm:$0xff]
    %v66 = vld [vmem:[%s0 + $0x8] sm:$0xff]
    %v67 = vld [vmem:[%s0 + $0x10] sm:$0xff]
    %v68 = vld [vmem:[%s0 + $0x18] sm:$0xff]
    %v69 = vld [vmem:[%s0 + $0x20] sm:$0xff]
    %v70 = vld [vmem:[%s0 + $0x28] sm:$0xff]
    %v71 = vld [vmem:[%s0 + $0x30] sm:$0xff]
    %v72 = vld [vmem:[%s0 + $0x38] sm:$0xff]
    %v73 = vld [vmem:[#allocation3] sm:$0xff]
    %v74 = vld [vmem:[#allocation3 + $0x8] sm:$0xff]
    %v75 = vld [vmem:[#allocation3 + $0x10] sm:$0xff]
    %v76 = vld [vmem:[#allocation3 + $0x18] sm:$0xff]
    %v77 = vld [vmem:[#allocation3 + $0x20] sm:$0xff]
    %v78 = vld [vmem:[#allocation3 + $0x28] sm:$0xff]
    %v79 = vld [vmem:[#allocation3 + $0x30] sm:$0xff]
    %v80 = vld [vmem:[#allocation3 + $0x38] sm:$0xff]
    %v81 = vld [vmem:[#allocation3 + $0x40] sm:$0xff]
    %v82 = vld [vmem:[#allocation3 + $0x48] sm:$0xff]
    %v83 = vld [vmem:[#allocation3 + $0x50] sm:$0xff]
    %v84 = vld [vmem:[#allocation3 + $0x58] sm:$0xff]
    %v85 = vld [vmem:[#allocation3 + $0x60] sm:$0xff]
    %v86 = vld [vmem:[#allocation3 + $0x68] sm:$0xff]
    %v87 = vld [vmem:[#allocation3 + $0x70] sm:$0xff]
    %v88 = vld [vmem:[#allocation3 + $0x78] sm:$0xff]
    %v89 = vld [vmem:[%s3] sm:$0x3]
    %v91 = vperm.slane %v89, 0
    %v92 = vperm.slane %v89, 1
    %vm95 = vcmask 523264
    %v97 = vsel %vm95, %v65, 0
    %v100 = vsel %vm95, %v66, 0
    %v103 = vsel %vm95, %v67, 0
    %v106 = vsel %vm95, %v68, 0
    %v109 = vsel %vm95, %v69, 0
    %v112 = vsel %vm95, %v70, 0
    %v115 = vsel %vm95, %v71, 0
    %v118 = vsel %vm95, %v72, 0
    %120 = vmatpush.msra.mxu0 0.0
    %121 = vmatpush.msra.mxu0 0.0
    %122 = vmatpush.msra.mxu0 0.0
    %123 = vmatpush.msra.mxu0 0.0
    %124 = vmatpush.msra.mxu0 0.0
    %125 = vmatpush.msra.mxu0 0.0
    %126 = vmatpush.msra.mxu0 0.0
    %127 = vmatpush.msra.mxu0 0.0
    %128 = vmatpush.msra.mxu0 %v87
    %129 = vmatpush.msra.mxu0 %v85
    %130 = vmatpush.msra.mxu0 %v83
    %131 = vmatpush.msra.mxu0 %v81
    %132 = vmatpush.msra.mxu0 %v79
    %133 = vmatpush.msra.mxu0 %v77
    %134 = vmatpush.msra.mxu0 %v75
    %135 = vmatpush.msra.mxu0 %v73
    %136 = vmatmul.f32.gmra.mxu0 %v97
    %v137 = vpop.f32.mrf.mxu0
    %v138 = vadd.f32 %v91, %v137
    %139 = vmatmul.f32.gmra.mxu0 %v100
    %v140 = vpop.f32.mrf.mxu0
    %v141 = vadd.f32 %v91, %v140
    %142 = vmatmul.f32.gmra.mxu0 %v103
    %v143 = vpop.f32.mrf.mxu0
    %v144 = vadd.f32 %v91, %v143
    %145 = vmatmul.f32.gmra.mxu0 %v106
    %v146 = vpop.f32.mrf.mxu0
    %v147 = vadd.f32 %v91, %v146
    %148 = vmatmul.f32.gmra.mxu0 %v109
    %v149 = vpop.f32.mrf.mxu0
    %v150 = vadd.f32 %v91, %v149
    %151 = vmatmul.f32.gmra.mxu0 %v112
    %v152 = vpop.f32.mrf.mxu0
    %v153 = vadd.f32 %v91, %v152
    %154 = vmatmul.f32.gmra.mxu0 %v115
    %v155 = vpop.f32.mrf.mxu0
    %v156 = vadd.f32 %v91, %v155
    %157 = vmatmul.f32.gmra.mxu0 %v118
    %v158 = vpop.f32.mrf.mxu0
    %v159 = vadd.f32 %v91, %v158
    %160 = vdwg.mxu0
    %161 = vmatpush.msra.mxu0 0.0
    %162 = vmatpush.msra.mxu0 0.0
    %163 = vmatpush.msra.mxu0 0.0
    %164 = vmatpush.msra.mxu0 0.0
    %165 = vmatpush.msra.mxu0 0.0
    %166 = vmatpush.msra.mxu0 0.0
    %167 = vmatpush.msra.mxu0 0.0
    %168 = vmatpush.msra.mxu0 0.0
    %169 = vmatpush.msra.mxu0 %v88
    %170 = vmatpush.msra.mxu0 %v86
    %171 = vmatpush.msra.mxu0 %v84
    %172 = vmatpush.msra.mxu0 %v82
    %173 = vmatpush.msra.mxu0 %v80
    %174 = vmatpush.msra.mxu0 %v78
    %175 = vmatpush.msra.mxu0 %v76
    %176 = vmatpush.msra.mxu0 %v74
    %177 = vmatmul.f32.gmra.mxu0 %v97
    %v178 = vpop.f32.mrf.mxu0
    %v179 = vadd.f32 %v92, %v178
    %180 = vmatmul.f32.gmra.mxu0 %v100
    %v181 = vpop.f32.mrf.mxu0
    %v182 = vadd.f32 %v92, %v181
    %183 = vmatmul.f32.gmra.mxu0 %v103
    %v184 = vpop.f32.mrf.mxu0
    %v185 = vadd.f32 %v92, %v184
    %186 = vmatmul.f32.gmra.mxu0 %v106
    %v187 = vpop.f32.mrf.mxu0
    %v188 = vadd.f32 %v92, %v187
    %189 = vmatmul.f32.gmra.mxu0 %v109
    %v190 = vpop.f32.mrf.mxu0
    %v191 = vadd.f32 %v92, %v190
    %192 = vmatmul.f32.gmra.mxu0 %v112
    %v193 = vpop.f32.mrf.mxu0
    %v194 = vadd.f32 %v92, %v193
    %195 = vmatmul.f32.gmra.mxu0 %v115
    %v196 = vpop.f32.mrf.mxu0
    %v197 = vadd.f32 %v92, %v196
    %198 = vmatmul.f32.gmra.mxu0 %v118
    %v199 = vpop.f32.mrf.mxu0
    %v200 = vadd.f32 %v92, %v199
    %201 = vdwg.mxu0
    %202 = vst [vmem:[#allocation2] sm:$0xff] %v138
    %203 = vst [vmem:[#allocation2 + $0x8] sm:$0xff] %v179
    %204 = vst [vmem:[#allocation2 + $0x10] sm:$0xff] %v141
    %205 = vst [vmem:[#allocation2 + $0x18] sm:$0xff] %v182
    %206 = vst [vmem:[#allocation2 + $0x20] sm:$0xff] %v144
    %207 = vst [vmem:[#allocation2 + $0x28] sm:$0xff] %v185
    %208 = vst [vmem:[#allocation2 + $0x30] sm:$0xff] %v147
    %209 = vst [vmem:[#allocation2 + $0x38] sm:$0xff] %v188
    %210 = vst [vmem:[#allocation2 + $0x40] sm:$0xff] %v150
    %211 = vst [vmem:[#allocation2 + $0x48] sm:$0xff] %v191
    %212 = vst [vmem:[#allocation2 + $0x50] sm:$0xff] %v153
    %213 = vst [vmem:[#allocation2 + $0x58] sm:$0xff] %v194
    %214 = vst [vmem:[#allocation2 + $0x60] sm:$0xff] %v156
    %215 = vst [vmem:[#allocation2 + $0x68] sm:$0xff] %v197
    %216 = vst [vmem:[#allocation2 + $0x70] sm:$0xff] %v159
    %217 = vst [vmem:[#allocation2 + $0x78] sm:$0xff] %v200
    %v218 = vld [vmem:[#allocation6] sm:$0xff]
    %v219 = vld [vmem:[#allocation6 + $0x8] sm:$0xff]
    %v220 = vld [vmem:[#allocation6 + $0x10] sm:$0xff]
    %v221 = vld [vmem:[#allocation6 + $0x18] sm:$0xff]
    %v222 = vld [vmem:[#allocation6 + $0x20] sm:$0xff]
    %v223 = vld [vmem:[#allocation6 + $0x28] sm:$0xff]
    %v224 = vld [vmem:[#allocation6 + $0x30] sm:$0xff]
    %v225 = vld [vmem:[#allocation6 + $0x38] sm:$0xff]
    %v226 = vld [vmem:[#allocation6 + $0x40] sm:$0xff]
    %v227 = vld [vmem:[#allocation6 + $0x48] sm:$0xff]
    %v228 = vld [vmem:[#allocation6 + $0x50] sm:$0xff]
    %v229 = vld [vmem:[#allocation6 + $0x58] sm:$0xff]
    %v230 = vld [vmem:[#allocation6 + $0x60] sm:$0xff]
    %v231 = vld [vmem:[#allocation6 + $0x68] sm:$0xff]
    %v232 = vld [vmem:[#allocation6 + $0x70] sm:$0xff]
    %v233 = vld [vmem:[#allocation6 + $0x78] sm:$0xff]
    %v234 = vld [vmem:[%s1] sm:$0xff]
    %235 = vset.pattern.permute.xlu0 0
    %236 = vperm.xlu0 %235, %v234
    %v237 = vpop.permute.xlu0 %236
    %v238 = vlaneseq
    %v239 = vand.u32 %v238, 127
    %vm240 = vcmp.lt.s32.totalorder %v239, 32
    %s241 = smul.u32 0, 2
    %s242 = smul.addr %s241, 8
    %s243 = scalar_lea.vmem [#allocation2], %s242
    %v244 = vld [vmem:[%s243] sm:$0xff]
    %v245 = vld [vmem:[%s243 + $0x8] sm:$0xff]
    %v247 = vsel %vm95, 0.0, 0
    %249 = vmatpush.msra.mxu0 0.0
    %250 = vmatpush.msra.mxu0 0.0
    %251 = vmatpush.msra.mxu0 0.0
    %252 = vmatpush.msra.mxu0 0.0
    %253 = vmatpush.msra.mxu0 0.0
    %254 = vmatpush.msra.mxu0 0.0
    %255 = vmatpush.msra.mxu0 0.0
    %256 = vmatpush.msra.mxu0 0.0
    %257 = vmatpush.msra.mxu0 %v232
    %258 = vmatpush.msra.mxu0 %v230
    %259 = vmatpush.msra.mxu0 %v228
    %260 = vmatpush.msra.mxu0 %v226
    %261 = vmatpush.msra.mxu0 %v224
    %262 = vmatpush.msra.mxu0 %v222
    %263 = vmatpush.msra.mxu0 %v220
    %264 = vmatpush.msra.mxu0 %v218
    %265 = vmatmul.f32.gmra.mxu0 %v247
    %v266 = vpop.f32.mrf.mxu0
    %v267 = vadd.f32 0.0, %v266
    %268 = vdwg.mxu0
    %269 = vmatpush.msra.mxu0 0.0
    %270 = vmatpush.msra.mxu0 0.0
    %271 = vmatpush.msra.mxu0 0.0
    %272 = vmatpush.msra.mxu0 0.0
    %273 = vmatpush.msra.mxu0 0.0
    %274 = vmatpush.msra.mxu0 0.0
    %275 = vmatpush.msra.mxu0 0.0
    %276 = vmatpush.msra.mxu0 0.0
    %277 = vmatpush.msra.mxu0 %v233
    %278 = vmatpush.msra.mxu0 %v231
    %279 = vmatpush.msra.mxu0 %v229
    %280 = vmatpush.msra.mxu0 %v227
    %281 = vmatpush.msra.mxu0 %v225
    %282 = vmatpush.msra.mxu0 %v223
    %283 = vmatpush.msra.mxu0 %v221
    %284 = vmatpush.msra.mxu0 %v219
    %285 = vmatmul.f32.gmra.mxu0 %v247
    %v286 = vpop.f32.mrf.mxu0
    %v287 = vadd.f32 0.0, %v286
    %288 = vdwg.mxu0
    %v289 = vadd.f32 %v244, %v267
    %v290 = vadd.f32 %v245, %v287
    %v291 = vxor.u32 %v289, 2147483648
    %v292 = vxor.u32 %v290, 2147483648
    %v293 = vmul.f32 %v291, 1.442695
    %v294 = vpow.pop %v293
    %v295 = vmul.f32 %v292, 1.442695
    %v296 = vpow.pop %v295
    %v297 = vadd.f32 %v294, 1.0
    %v298 = vadd.f32 %v296, 1.0
    %v299 = vrcp.pop %v297
    %v300 = vmul.f32 %v297, %v299
    %v301 = vsub.f32 1.0, %v300
    %v302 = vmul.f32 %v299, %v301
    %v303 = vadd.f32 %v299, %v302
    %vm304 = vweird.f32 %v297
    %vm305 = vweird.f32 %v299
    %vm306 = vmor %vm304, %vm305
    %v307 = vsel %vm306, %v299, %v303
    %v308 = vand.u32 2147483647, %v297
    %vm309 = vcmp.eq.f32.partialorder %v308, 8.507059e+37
    %v310 = vand.u32 %v297, 2147483648
    %v311 = vor.u32 1.1754944e-38, %v310
    %v312 = vsel %vm309, %v311, %v307
    %v313 = vmul.f32 1.0, %v312
    %v314 = vrcp.pop %v298
    %v315 = vmul.f32 %v298, %v314
    %v316 = vsub.f32 1.0, %v315
    %v317 = vmul.f32 %v314, %v316
    %v318 = vadd.f32 %v314, %v317
    %vm319 = vweird.f32 %v298
    %vm320 = vweird.f32 %v314
    %vm321 = vmor %vm319, %vm320
    %v322 = vsel %vm321, %v314, %v318
    %v323 = vand.u32 2147483647, %v298
    %vm324 = vcmp.eq.f32.partialorder %v323, 8.507059e+37
    %v325 = vand.u32 %v298, 2147483648
    %v326 = vor.u32 1.1754944e-38, %v325
    %v327 = vsel %vm324, %v326, %v322
    %v328 = vmul.f32 1.0, %v327
    %v329 = vtanh.pop %v290
    %v330 = vmul.f32 %v313, 0.0
    %332 = vrot.lane.b32.xlu0 %v329, 64
    %v333 = vpop.permute.xlu0 %332
    %v335 = vmul.f32 %v313, %v333
    %337 = vrot.lane.b32.xlu0 %v335, 64
    %v338 = vpop.permute.xlu0 %337
    %v340 = vadd.f32 %v330, %v338
    %v341 = vtanh.pop %v340
    %343 = vrot.lane.b32.xlu0 %v341, 64
    %v344 = vpop.permute.xlu0 %343
    %v346 = vmul.f32 %v328, %v344
    %v347 = vsel %vm240, 0, 7
    %vm348 = vcmp.lt.s32.totalorder %v347, %v237
    %v349 = vsel %vm348, %v346, 0.0
    %351 = vrot.lane.b32.xlu0 %v340, 64
    %v352 = vpop.permute.xlu0 %351
    %v354 = vsel %vm348, %v352, 0.0
    %v355 = vadd.f32 %v349, 0.0
    %s356 = smul.u32 1, 2
    %s357 = smul.addr %s356, 8
    %s358 = scalar_lea.vmem [#allocation2], %s357
    %v359 = vld [vmem:[%s358] sm:$0xff]
    %v360 = vld [vmem:[%s358 + $0x8] sm:$0xff]
    %v362 = vsel %vm95, %v349, 0
    %364 = vmatpush.msra.mxu0 0.0
    %365 = vmatpush.msra.mxu0 0.0
    %366 = vmatpush.msra.mxu0 0.0
    %367 = vmatpush.msra.mxu0 0.0
    %368 = vmatpush.msra.mxu0 0.0
    %369 = vmatpush.msra.mxu0 0.0
    %370 = vmatpush.msra.mxu0 0.0
    %371 = vmatpush.msra.mxu0 0.0
    %372 = vmatpush.msra.mxu0 %v232
    %373 = vmatpush.msra.mxu0 %v230
    %374 = vmatpush.msra.mxu0 %v228
    %375 = vmatpush.msra.mxu0 %v226
    %376 = vmatpush.msra.mxu0 %v224
    %377 = vmatpush.msra.mxu0 %v222
    %378 = vmatpush.msra.mxu0 %v220
    %379 = vmatpush.msra.mxu0 %v218
    %380 = vmatmul.f32.gmra.mxu0 %v362
    %v381 = vpop.f32.mrf.mxu0
    %v382 = vadd.f32 0.0, %v381
    %383 = vdwg.mxu0
    %384 = vmatpush.msra.mxu0 0.0
    %385 = vmatpush.msra.mxu0 0.0
    %386 = vmatpush.msra.mxu0 0.0
    %387 = vmatpush.msra.mxu0 0.0
    %388 = vmatpush.msra.mxu0 0.0
    %389 = vmatpush.msra.mxu0 0.0
    %390 = vmatpush.msra.mxu0 0.0
    %391 = vmatpush.msra.mxu0 0.0
    %392 = vmatpush.msra.mxu0 %v233
    %393 = vmatpush.msra.mxu0 %v231
    %394 = vmatpush.msra.mxu0 %v229
    %395 = vmatpush.msra.mxu0 %v227
    %396 = vmatpush.msra.mxu0 %v225
    %397 = vmatpush.msra.mxu0 %v223
    %398 = vmatpush.msra.mxu0 %v221
    %399 = vmatpush.msra.mxu0 %v219
    %400 = vmatmul.f32.gmra.mxu0 %v362
    %v401 = vpop.f32.mrf.mxu0
    %v402 = vadd.f32 0.0, %v401
    %403 = vdwg.mxu0
    %v404 = vadd.f32 %v359, %v382
    %v405 = vadd.f32 %v360, %v402
    %v406 = vxor.u32 %v404, 2147483648
    %v407 = vxor.u32 %v405, 2147483648
    %v408 = vmul.f32 %v406, 1.442695
    %v409 = vpow.pop %v408
    %v410 = vmul.f32 %v407, 1.442695
    %v411 = vpow.pop %v410
    %v412 = vadd.f32 %v409, 1.0
    %v413 = vadd.f32 %v411, 1.0
    %v414 = vrcp.pop %v412
    %v415 = vmul.f32 %v412, %v414
    %v416 = vsub.f32 1.0, %v415
    %v417 = vmul.f32 %v414, %v416
    %v418 = vadd.f32 %v414, %v417
    %vm419 = vweird.f32 %v412
    %vm420 = vweird.f32 %v414
    %vm421 = vmor %vm419, %vm420
    %v422 = vsel %vm421, %v414, %v418
    %v423 = vand.u32 2147483647, %v412
    %vm424 = vcmp.eq.f32.partialorder %v423, 8.507059e+37
    %v425 = vand.u32 %v412, 2147483648
    %v426 = vor.u32 1.1754944e-38, %v425
    %v427 = vsel %vm424, %v426, %v422
    %v428 = vmul.f32 1.0, %v427
    %v429 = vrcp.pop %v413
    %v430 = vmul.f32 %v413, %v429
    %v431 = vsub.f32 1.0, %v430
    %v432 = vmul.f32 %v429, %v431
    %v433 = vadd.f32 %v429, %v432
    %vm434 = vweird.f32 %v413
    %vm435 = vweird.f32 %v429
    %vm436 = vmor %vm434, %vm435
    %v437 = vsel %vm436, %v429, %v433
    %v438 = vand.u32 2147483647, %v413
    %vm439 = vcmp.eq.f32.partialorder %v438, 8.507059e+37
    %v440 = vand.u32 %v413, 2147483648
    %v441 = vor.u32 1.1754944e-38, %v440
    %v442 = vsel %vm439, %v441, %v437
    %v443 = vmul.f32 1.0, %v442
    %v444 = vtanh.pop %v405
    %446 = vrot.lane.b32.xlu0 %v354, 64
    %v447 = vpop.permute.xlu0 %446
    %v449 = vmul.f32 %v428, %v447
    %451 = vrot.lane.b32.xlu0 %v444, 64
    %v452 = vpop.permute.xlu0 %451
    %v454 = vmul.f32 %v428, %v452
    %456 = vrot.lane.b32.xlu0 %v454, 64
    %v457 = vpop.permute.xlu0 %456
    %v459 = vadd.f32 %v449, %v457
    %v460 = vtanh.pop %v459
    %462 = vrot.lane.b32.xlu0 %v460, 64
    %v463 = vpop.permute.xlu0 %462
    %v465 = vmul.f32 %v443, %v463
    %v466 = vsel %vm240, 1, 6
    %vm467 = vcmp.lt.s32.totalorder %v466, %v237
    %v468 = vsel %vm467, %v465, %v349
    %470 = vrot.lane.b32.xlu0 %v459, 64
    %v471 = vpop.permute.xlu0 %470
    %v473 = vsel %vm467, %v471, %v354
    %v474 = vsel %vm467, %v465, 0.0
    %v475 = vadd.f32 %v355, %v474
    %s476 = smul.u32 2, 2
    %s477 = smul.addr %s476, 8
    %s478 = scalar_lea.vmem [#allocation2], %s477
    %v479 = vld [vmem:[%s478] sm:$0xff]
    %v480 = vld [vmem:[%s478 + $0x8] sm:$0xff]
    %v482 = vsel %vm95, %v468, 0
    %484 = vmatpush.msra.mxu0 0.0
    %485 = vmatpush.msra.mxu0 0.0
    %486 = vmatpush.msra.mxu0 0.0
    %487 = vmatpush.msra.mxu0 0.0
    %488 = vmatpush.msra.mxu0 0.0
    %489 = vmatpush.msra.mxu0 0.0
    %490 = vmatpush.msra.mxu0 0.0
    %491 = vmatpush.msra.mxu0 0.0
    %492 = vmatpush.msra.mxu0 %v232
    %493 = vmatpush.msra.mxu0 %v230
    %494 = vmatpush.msra.mxu0 %v228
    %495 = vmatpush.msra.mxu0 %v226
    %496 = vmatpush.msra.mxu0 %v224
    %497 = vmatpush.msra.mxu0 %v222
    %498 = vmatpush.msra.mxu0 %v220
    %499 = vmatpush.msra.mxu0 %v218
    %500 = vmatmul.f32.gmra.mxu0 %v482
    %v501 = vpop.f32.mrf.mxu0
    %v502 = vadd.f32 0.0, %v501
    %503 = vdwg.mxu0
    %504 = vmatpush.msra.mxu0 0.0
    %505 = vmatpush.msra.mxu0 0.0
    %506 = vmatpush.msra.mxu0 0.0
    %507 = vmatpush.msra.mxu0 0.0
    %508 = vmatpush.msra.mxu0 0.0
    %509 = vmatpush.msra.mxu0 0.0
    %510 = vmatpush.msra.mxu0 0.0
    %511 = vmatpush.msra.mxu0 0.0
    %512 = vmatpush.msra.mxu0 %v233
    %513 = vmatpush.msra.mxu0 %v231
    %514 = vmatpush.msra.mxu0 %v229
    %515 = vmatpush.msra.mxu0 %v227
    %516 = vmatpush.msra.mxu0 %v225
    %517 = vmatpush.msra.mxu0 %v223
    %518 = vmatpush.msra.mxu0 %v221
    %519 = vmatpush.msra.mxu0 %v219
    %520 = vmatmul.f32.gmra.mxu0 %v482
    %v521 = vpop.f32.mrf.mxu0
    %v522 = vadd.f32 0.0, %v521
    %523 = vdwg.mxu0
    %v524 = vadd.f32 %v479, %v502
    %v525 = vadd.f32 %v480, %v522
    %v526 = vxor.u32 %v524, 2147483648
    %v527 = vxor.u32 %v525, 2147483648
    %v528 = vmul.f32 %v526, 1.442695
    %v529 = vpow.pop %v528
    %v530 = vmul.f32 %v527, 1.442695
    %v531 = vpow.pop %v530
    %v532 = vadd.f32 %v529, 1.0
    %v533 = vadd.f32 %v531, 1.0
    %v534 = vrcp.pop %v532
    %v535 = vmul.f32 %v532, %v534
    %v536 = vsub.f32 1.0, %v535
    %v537 = vmul.f32 %v534, %v536
    %v538 = vadd.f32 %v534, %v537
    %vm539 = vweird.f32 %v532
    %vm540 = vweird.f32 %v534
    %vm541 = vmor %vm539, %vm540
    %v542 = vsel %vm541, %v534, %v538
    %v543 = vand.u32 2147483647, %v532
    %vm544 = vcmp.eq.f32.partialorder %v543, 8.507059e+37
    %v545 = vand.u32 %v532, 2147483648
    %v546 = vor.u32 1.1754944e-38, %v545
    %v547 = vsel %vm544, %v546, %v542
    %v548 = vmul.f32 1.0, %v547
    %v549 = vrcp.pop %v533
    %v550 = vmul.f32 %v533, %v549
    %v551 = vsub.f32 1.0, %v550
    %v552 = vmul.f32 %v549, %v551
    %v553 = vadd.f32 %v549, %v552
    %vm554 = vweird.f32 %v533
    %vm555 = vweird.f32 %v549
    %vm556 = vmor %vm554, %vm555
    %v557 = vsel %vm556, %v549, %v553
    %v558 = vand.u32 2147483647, %v533
    %vm559 = vcmp.eq.f32.partialorder %v558, 8.507059e+37
    %v560 = vand.u32 %v533, 2147483648
    %v561 = vor.u32 1.1754944e-38, %v560
    %v562 = vsel %vm559, %v561, %v557
    %v563 = vmul.f32 1.0, %v562
    %v564 = vtanh.pop %v525
    %566 = vrot.lane.b32.xlu0 %v473, 64
    %v567 = vpop.permute.xlu0 %566
    %v569 = vmul.f32 %v548, %v567
    %571 = vrot.lane.b32.xlu0 %v564, 64
    %v572 = vpop.permute.xlu0 %571
    %v574 = vmul.f32 %v548, %v572
    %576 = vrot.lane.b32.xlu0 %v574, 64
    %v577 = vpop.permute.xlu0 %576
    %v579 = vadd.f32 %v569, %v577
    %v580 = vtanh.pop %v579
    %582 = vrot.lane.b32.xlu0 %v580, 64
    %v583 = vpop.permute.xlu0 %582
    %v585 = vmul.f32 %v563, %v583
    %v586 = vsel %vm240, 2, 5
    %vm587 = vcmp.lt.s32.totalorder %v586, %v237
    %v588 = vsel %vm587, %v585, %v468
    %590 = vrot.lane.b32.xlu0 %v579, 64
    %v591 = vpop.permute.xlu0 %590
    %v593 = vsel %vm587, %v591, %v473
    %v594 = vsel %vm587, %v585, 0.0
    %v595 = vadd.f32 %v475, %v594
    %s596 = smul.u32 3, 2
    %s597 = smul.addr %s596, 8
    %s598 = scalar_lea.vmem [#allocation2], %s597
    %v599 = vld [vmem:[%s598] sm:$0xff]
    %v600 = vld [vmem:[%s598 + $0x8] sm:$0xff]
    %v602 = vsel %vm95, %v588, 0
    %604 = vmatpush.msra.mxu0 0.0
    %605 = vmatpush.msra.mxu0 0.0
    %606 = vmatpush.msra.mxu0 0.0
    %607 = vmatpush.msra.mxu0 0.0
    %608 = vmatpush.msra.mxu0 0.0
    %609 = vmatpush.msra.mxu0 0.0
    %610 = vmatpush.msra.mxu0 0.0
    %611 = vmatpush.msra.mxu0 0.0
    %612 = vmatpush.msra.mxu0 %v232
    %613 = vmatpush.msra.mxu0 %v230
    %614 = vmatpush.msra.mxu0 %v228
    %615 = vmatpush.msra.mxu0 %v226
    %616 = vmatpush.msra.mxu0 %v224
    %617 = vmatpush.msra.mxu0 %v222
    %618 = vmatpush.msra.mxu0 %v220
    %619 = vmatpush.msra.mxu0 %v218
    %620 = vmatmul.f32.gmra.mxu0 %v602
    %v621 = vpop.f32.mrf.mxu0
    %v622 = vadd.f32 0.0, %v621
    %623 = vdwg.mxu0
    %624 = vmatpush.msra.mxu0 0.0
    %625 = vmatpush.msra.mxu0 0.0
    %626 = vmatpush.msra.mxu0 0.0
    %627 = vmatpush.msra.mxu0 0.0
    %628 = vmatpush.msra.mxu0 0.0
    %629 = vmatpush.msra.mxu0 0.0
    %630 = vmatpush.msra.mxu0 0.0
    %631 = vmatpush.msra.mxu0 0.0
    %632 = vmatpush.msra.mxu0 %v233
    %633 = vmatpush.msra.mxu0 %v231
    %634 = vmatpush.msra.mxu0 %v229
    %635 = vmatpush.msra.mxu0 %v227
    %636 = vmatpush.msra.mxu0 %v225
    %637 = vmatpush.msra.mxu0 %v223
    %638 = vmatpush.msra.mxu0 %v221
    %639 = vmatpush.msra.mxu0 %v219
    %640 = vmatmul.f32.gmra.mxu0 %v602
    %v641 = vpop.f32.mrf.mxu0
    %v642 = vadd.f32 0.0, %v641
    %643 = vdwg.mxu0
    %v644 = vadd.f32 %v599, %v622
    %v645 = vadd.f32 %v600, %v642
    %v646 = vxor.u32 %v644, 2147483648
    %v647 = vxor.u32 %v645, 2147483648
    %v648 = vmul.f32 %v646, 1.442695
    %v649 = vpow.pop %v648
    %v650 = vmul.f32 %v647, 1.442695
    %v651 = vpow.pop %v650
    %v652 = vadd.f32 %v649, 1.0
    %v653 = vadd.f32 %v651, 1.0
    %v654 = vrcp.pop %v652
    %v655 = vmul.f32 %v652, %v654
    %v656 = vsub.f32 1.0, %v655
    %v657 = vmul.f32 %v654, %v656
    %v658 = vadd.f32 %v654, %v657
    %vm659 = vweird.f32 %v652
    %vm660 = vweird.f32 %v654
    %vm661 = vmor %vm659, %vm660
    %v662 = vsel %vm661, %v654, %v658
    %v663 = vand.u32 2147483647, %v652
    %vm664 = vcmp.eq.f32.partialorder %v663, 8.507059e+37
    %v665 = vand.u32 %v652, 2147483648
    %v666 = vor.u32 1.1754944e-38, %v665
    %v667 = vsel %vm664, %v666, %v662
    %v668 = vmul.f32 1.0, %v667
    %v669 = vrcp.pop %v653
    %v670 = vmul.f32 %v653, %v669
    %v671 = vsub.f32 1.0, %v670
    %v672 = vmul.f32 %v669, %v671
    %v673 = vadd.f32 %v669, %v672
    %vm674 = vweird.f32 %v653
    %vm675 = vweird.f32 %v669
    %vm676 = vmor %vm674, %vm675
    %v677 = vsel %vm676, %v669, %v673
    %v678 = vand.u32 2147483647, %v653
    %vm679 = vcmp.eq.f32.partialorder %v678, 8.507059e+37
    %v680 = vand.u32 %v653, 2147483648
    %v681 = vor.u32 1.1754944e-38, %v680
    %v682 = vsel %vm679, %v681, %v677
    %v683 = vmul.f32 1.0, %v682
    %v684 = vtanh.pop %v645
    %686 = vrot.lane.b32.xlu0 %v593, 64
    %v687 = vpop.permute.xlu0 %686
    %v689 = vmul.f32 %v668, %v687
    %691 = vrot.lane.b32.xlu0 %v684, 64
    %v692 = vpop.permute.xlu0 %691
    %v694 = vmul.f32 %v668, %v692
    %696 = vrot.lane.b32.xlu0 %v694, 64
    %v697 = vpop.permute.xlu0 %696
    %v699 = vadd.f32 %v689, %v697
    %v700 = vtanh.pop %v699
    %702 = vrot.lane.b32.xlu0 %v700, 64
    %v703 = vpop.permute.xlu0 %702
    %v705 = vmul.f32 %v683, %v703
    %v706 = vsel %vm240, 3, 4
    %vm707 = vcmp.lt.s32.totalorder %v706, %v237
    %v708 = vsel %vm707, %v705, %v588
    %710 = vrot.lane.b32.xlu0 %v699, 64
    %v711 = vpop.permute.xlu0 %710
    %v713 = vsel %vm707, %v711, %v593
    %v714 = vsel %vm707, %v705, 0.0
    %v715 = vadd.f32 %v595, %v714
    %s716 = smul.u32 4, 2
    %s717 = smul.addr %s716, 8
    %s718 = scalar_lea.vmem [#allocation2], %s717
    %v719 = vld [vmem:[%s718] sm:$0xff]
    %v720 = vld [vmem:[%s718 + $0x8] sm:$0xff]
    %v722 = vsel %vm95, %v708, 0
    %724 = vmatpush.msra.mxu0 0.0
    %725 = vmatpush.msra.mxu0 0.0
    %726 = vmatpush.msra.mxu0 0.0
    %727 = vmatpush.msra.mxu0 0.0
    %728 = vmatpush.msra.mxu0 0.0
    %729 = vmatpush.msra.mxu0 0.0
    %730 = vmatpush.msra.mxu0 0.0
    %731 = vmatpush.msra.mxu0 0.0
    %732 = vmatpush.msra.mxu0 %v232
    %733 = vmatpush.msra.mxu0 %v230
    %734 = vmatpush.msra.mxu0 %v228
    %735 = vmatpush.msra.mxu0 %v226
    %736 = vmatpush.msra.mxu0 %v224
    %737 = vmatpush.msra.mxu0 %v222
    %738 = vmatpush.msra.mxu0 %v220
    %739 = vmatpush.msra.mxu0 %v218
    %740 = vmatmul.f32.gmra.mxu0 %v722
    %v741 = vpop.f32.mrf.mxu0
    %v742 = vadd.f32 0.0, %v741
    %743 = vdwg.mxu0
    %744 = vmatpush.msra.mxu0 0.0
    %745 = vmatpush.msra.mxu0 0.0
    %746 = vmatpush.msra.mxu0 0.0
    %747 = vmatpush.msra.mxu0 0.0
    %748 = vmatpush.msra.mxu0 0.0
    %749 = vmatpush.msra.mxu0 0.0
    %750 = vmatpush.msra.mxu0 0.0
    %751 = vmatpush.msra.mxu0 0.0
    %752 = vmatpush.msra.mxu0 %v233
    %753 = vmatpush.msra.mxu0 %v231
    %754 = vmatpush.msra.mxu0 %v229
    %755 = vmatpush.msra.mxu0 %v227
    %756 = vmatpush.msra.mxu0 %v225
    %757 = vmatpush.msra.mxu0 %v223
    %758 = vmatpush.msra.mxu0 %v221
    %759 = vmatpush.msra.mxu0 %v219
    %760 = vmatmul.f32.gmra.mxu0 %v722
    %v761 = vpop.f32.mrf.mxu0
    %v762 = vadd.f32 0.0, %v761
    %763 = vdwg.mxu0
    %v764 = vadd.f32 %v719, %v742
    %v765 = vadd.f32 %v720, %v762
    %v766 = vxor.u32 %v764, 2147483648
    %v767 = vxor.u32 %v765, 2147483648
    %v768 = vmul.f32 %v766, 1.442695
    %v769 = vpow.pop %v768
    %v770 = vmul.f32 %v767, 1.442695
    %v771 = vpow.pop %v770
    %v772 = vadd.f32 %v769, 1.0
    %v773 = vadd.f32 %v771, 1.0
    %v774 = vrcp.pop %v772
    %v775 = vmul.f32 %v772, %v774
    %v776 = vsub.f32 1.0, %v775
    %v777 = vmul.f32 %v774, %v776
    %v778 = vadd.f32 %v774, %v777
    %vm779 = vweird.f32 %v772
    %vm780 = vweird.f32 %v774
    %vm781 = vmor %vm779, %vm780
    %v782 = vsel %vm781, %v774, %v778
    %v783 = vand.u32 2147483647, %v772
    %vm784 = vcmp.eq.f32.partialorder %v783, 8.507059e+37
    %v785 = vand.u32 %v772, 2147483648
    %v786 = vor.u32 1.1754944e-38, %v785
    %v787 = vsel %vm784, %v786, %v782
    %v788 = vmul.f32 1.0, %v787
    %v789 = vrcp.pop %v773
    %v790 = vmul.f32 %v773, %v789
    %v791 = vsub.f32 1.0, %v790
    %v792 = vmul.f32 %v789, %v791
    %v793 = vadd.f32 %v789, %v792
    %vm794 = vweird.f32 %v773
    %vm795 = vweird.f32 %v789
    %vm796 = vmor %vm794, %vm795
    %v797 = vsel %vm796, %v789, %v793
    %v798 = vand.u32 2147483647, %v773
    %vm799 = vcmp.eq.f32.partialorder %v798, 8.507059e+37
    %v800 = vand.u32 %v773, 2147483648
    %v801 = vor.u32 1.1754944e-38, %v800
    %v802 = vsel %vm799, %v801, %v797
    %v803 = vmul.f32 1.0, %v802
    %v804 = vtanh.pop %v765
    %806 = vrot.lane.b32.xlu0 %v713, 64
    %v807 = vpop.permute.xlu0 %806
    %v809 = vmul.f32 %v788, %v807
    %811 = vrot.lane.b32.xlu0 %v804, 64
    %v812 = vpop.permute.xlu0 %811
    %v814 = vmul.f32 %v788, %v812
    %816 = vrot.lane.b32.xlu0 %v814, 64
    %v817 = vpop.permute.xlu0 %816
    %v819 = vadd.f32 %v809, %v817
    %v820 = vtanh.pop %v819
    %822 = vrot.lane.b32.xlu0 %v820, 64
    %v823 = vpop.permute.xlu0 %822
    %v825 = vmul.f32 %v803, %v823
    %v826 = vsel %vm240, 4, 3
    %vm827 = vcmp.lt.s32.totalorder %v826, %v237
    %v828 = vsel %vm827, %v825, %v708
    %830 = vrot.lane.b32.xlu0 %v819, 64
    %v831 = vpop.permute.xlu0 %830
    %v833 = vsel %vm827, %v831, %v713
    %v834 = vsel %vm827, %v825, 0.0
    %v835 = vadd.f32 %v715, %v834
    %s836 = smul.u32 5, 2
    %s837 = smul.addr %s836, 8
    %s838 = scalar_lea.vmem [#allocation2], %s837
    %v839 = vld [vmem:[%s838] sm:$0xff]
    %v840 = vld [vmem:[%s838 + $0x8] sm:$0xff]
    %v842 = vsel %vm95, %v828, 0
    %844 = vmatpush.msra.mxu0 0.0
    %845 = vmatpush.msra.mxu0 0.0
    %846 = vmatpush.msra.mxu0 0.0
    %847 = vmatpush.msra.mxu0 0.0
    %848 = vmatpush.msra.mxu0 0.0
    %849 = vmatpush.msra.mxu0 0.0
    %850 = vmatpush.msra.mxu0 0.0
    %851 = vmatpush.msra.mxu0 0.0
    %852 = vmatpush.msra.mxu0 %v232
    %853 = vmatpush.msra.mxu0 %v230
    %854 = vmatpush.msra.mxu0 %v228
    %855 = vmatpush.msra.mxu0 %v226
    %856 = vmatpush.msra.mxu0 %v224
    %857 = vmatpush.msra.mxu0 %v222
    %858 = vmatpush.msra.mxu0 %v220
    %859 = vmatpush.msra.mxu0 %v218
    %860 = vmatmul.f32.gmra.mxu0 %v842
    %v861 = vpop.f32.mrf.mxu0
    %v862 = vadd.f32 0.0, %v861
    %863 = vdwg.mxu0
    %864 = vmatpush.msra.mxu0 0.0
    %865 = vmatpush.msra.mxu0 0.0
    %866 = vmatpush.msra.mxu0 0.0
    %867 = vmatpush.msra.mxu0 0.0
    %868 = vmatpush.msra.mxu0 0.0
    %869 = vmatpush.msra.mxu0 0.0
    %870 = vmatpush.msra.mxu0 0.0
    %871 = vmatpush.msra.mxu0 0.0
    %872 = vmatpush.msra.mxu0 %v233
    %873 = vmatpush.msra.mxu0 %v231
    %874 = vmatpush.msra.mxu0 %v229
    %875 = vmatpush.msra.mxu0 %v227
    %876 = vmatpush.msra.mxu0 %v225
    %877 = vmatpush.msra.mxu0 %v223
    %878 = vmatpush.msra.mxu0 %v221
    %879 = vmatpush.msra.mxu0 %v219
    %880 = vmatmul.f32.gmra.mxu0 %v842
    %v881 = vpop.f32.mrf.mxu0
    %v882 = vadd.f32 0.0, %v881
    %883 = vdwg.mxu0
    %v884 = vadd.f32 %v839, %v862
    %v885 = vadd.f32 %v840, %v882
    %v886 = vxor.u32 %v884, 2147483648
    %v887 = vxor.u32 %v885, 2147483648
    %v888 = vmul.f32 %v886, 1.442695
    %v889 = vpow.pop %v888
    %v890 = vmul.f32 %v887, 1.442695
    %v891 = vpow.pop %v890
    %v892 = vadd.f32 %v889, 1.0
    %v893 = vadd.f32 %v891, 1.0
    %v894 = vrcp.pop %v892
    %v895 = vmul.f32 %v892, %v894
    %v896 = vsub.f32 1.0, %v895
    %v897 = vmul.f32 %v894, %v896
    %v898 = vadd.f32 %v894, %v897
    %vm899 = vweird.f32 %v892
    %vm900 = vweird.f32 %v894
    %vm901 = vmor %vm899, %vm900
    %v902 = vsel %vm901, %v894, %v898
    %v903 = vand.u32 2147483647, %v892
    %vm904 = vcmp.eq.f32.partialorder %v903, 8.507059e+37
    %v905 = vand.u32 %v892, 2147483648
    %v906 = vor.u32 1.1754944e-38, %v905
    %v907 = vsel %vm904, %v906, %v902
    %v908 = vmul.f32 1.0, %v907
    %v909 = vrcp.pop %v893
    %v910 = vmul.f32 %v893, %v909
    %v911 = vsub.f32 1.0, %v910
    %v912 = vmul.f32 %v909, %v911
    %v913 = vadd.f32 %v909, %v912
    %vm914 = vweird.f32 %v893
    %vm915 = vweird.f32 %v909
    %vm916 = vmor %vm914, %vm915
    %v917 = vsel %vm916, %v909, %v913
    %v918 = vand.u32 2147483647, %v893
    %vm919 = vcmp.eq.f32.partialorder %v918, 8.507059e+37
    %v920 = vand.u32 %v893, 2147483648
    %v921 = vor.u32 1.1754944e-38, %v920
    %v922 = vsel %vm919, %v921, %v917
    %v923 = vmul.f32 1.0, %v922
    %v924 = vtanh.pop %v885
    %926 = vrot.lane.b32.xlu0 %v833, 64
    %v927 = vpop.permute.xlu0 %926
    %v929 = vmul.f32 %v908, %v927
    %931 = vrot.lane.b32.xlu0 %v924, 64
    %v932 = vpop.permute.xlu0 %931
    %v934 = vmul.f32 %v908, %v932
    %936 = vrot.lane.b32.xlu0 %v934, 64
    %v937 = vpop.permute.xlu0 %936
    %v939 = vadd.f32 %v929, %v937
    %v940 = vtanh.pop %v939
    %942 = vrot.lane.b32.xlu0 %v940, 64
    %v943 = vpop.permute.xlu0 %942
    %v945 = vmul.f32 %v923, %v943
    %v946 = vsel %vm240, 5, 2
    %vm947 = vcmp.lt.s32.totalorder %v946, %v237
    %v948 = vsel %vm947, %v945, %v828
    %950 = vrot.lane.b32.xlu0 %v939, 64
    %v951 = vpop.permute.xlu0 %950
    %v953 = vsel %vm947, %v951, %v833
    %v954 = vsel %vm947, %v945, 0.0
    %v955 = vadd.f32 %v835, %v954
    %s956 = smul.u32 6, 2
    %s957 = smul.addr %s956, 8
    %s958 = scalar_lea.vmem [#allocation2], %s957
    %v959 = vld [vmem:[%s958] sm:$0xff]
    %v960 = vld [vmem:[%s958 + $0x8] sm:$0xff]
    %v962 = vsel %vm95, %v948, 0
    %964 = vmatpush.msra.mxu0 0.0
    %965 = vmatpush.msra.mxu0 0.0
    %966 = vmatpush.msra.mxu0 0.0
    %967 = vmatpush.msra.mxu0 0.0
    %968 = vmatpush.msra.mxu0 0.0
    %969 = vmatpush.msra.mxu0 0.0
    %970 = vmatpush.msra.mxu0 0.0
    %971 = vmatpush.msra.mxu0 0.0
    %972 = vmatpush.msra.mxu0 %v232
    %973 = vmatpush.msra.mxu0 %v230
    %974 = vmatpush.msra.mxu0 %v228
    %975 = vmatpush.msra.mxu0 %v226
    %976 = vmatpush.msra.mxu0 %v224
    %977 = vmatpush.msra.mxu0 %v222
    %978 = vmatpush.msra.mxu0 %v220
    %979 = vmatpush.msra.mxu0 %v218
    %980 = vmatmul.f32.gmra.mxu0 %v962
    %v981 = vpop.f32.mrf.mxu0
    %v982 = vadd.f32 0.0, %v981
    %983 = vdwg.mxu0
    %984 = vmatpush.msra.mxu0 0.0
    %985 = vmatpush.msra.mxu0 0.0
    %986 = vmatpush.msra.mxu0 0.0
    %987 = vmatpush.msra.mxu0 0.0
    %988 = vmatpush.msra.mxu0 0.0
    %989 = vmatpush.msra.mxu0 0.0
    %990 = vmatpush.msra.mxu0 0.0
    %991 = vmatpush.msra.mxu0 0.0
    %992 = vmatpush.msra.mxu0 %v233
    %993 = vmatpush.msra.mxu0 %v231
    %994 = vmatpush.msra.mxu0 %v229
    %995 = vmatpush.msra.mxu0 %v227
    %996 = vmatpush.msra.mxu0 %v225
    %997 = vmatpush.msra.mxu0 %v223
    %998 = vmatpush.msra.mxu0 %v221
    %999 = vmatpush.msra.mxu0 %v219
    %1000 = vmatmul.f32.gmra.mxu0 %v962
    %v1001 = vpop.f32.mrf.mxu0
    %v1002 = vadd.f32 0.0, %v1001
    %1003 = vdwg.mxu0
    %v1004 = vadd.f32 %v959, %v982
    %v1005 = vadd.f32 %v960, %v1002
    %v1006 = vxor.u32 %v1004, 2147483648
    %v1007 = vxor.u32 %v1005, 2147483648
    %v1008 = vmul.f32 %v1006, 1.442695
    %v1009 = vpow.pop %v1008
    %v1010 = vmul.f32 %v1007, 1.442695
    %v1011 = vpow.pop %v1010
    %v1012 = vadd.f32 %v1009, 1.0
    %v1013 = vadd.f32 %v1011, 1.0
    %v1014 = vrcp.pop %v1012
    %v1015 = vmul.f32 %v1012, %v1014
    %v1016 = vsub.f32 1.0, %v1015
    %v1017 = vmul.f32 %v1014, %v1016
    %v1018 = vadd.f32 %v1014, %v1017
    %vm1019 = vweird.f32 %v1012
    %vm1020 = vweird.f32 %v1014
    %vm1021 = vmor %vm1019, %vm1020
    %v1022 = vsel %vm1021, %v1014, %v1018
    %v1023 = vand.u32 2147483647, %v1012
    %vm1024 = vcmp.eq.f32.partialorder %v1023, 8.507059e+37
    %v1025 = vand.u32 %v1012, 2147483648
    %v1026 = vor.u32 1.1754944e-38, %v1025
    %v1027 = vsel %vm1024, %v1026, %v1022
    %v1028 = vmul.f32 1.0, %v1027
    %v1029 = vrcp.pop %v1013
    %v1030 = vmul.f32 %v1013, %v1029
    %v1031 = vsub.f32 1.0, %v1030
    %v1032 = vmul.f32 %v1029, %v1031
    %v1033 = vadd.f32 %v1029, %v1032
    %vm1034 = vweird.f32 %v1013
    %vm1035 = vweird.f32 %v1029
    %vm1036 = vmor %vm1034, %vm1035
    %v1037 = vsel %vm1036, %v1029, %v1033
    %v1038 = vand.u32 2147483647, %v1013
    %vm1039 = vcmp.eq.f32.partialorder %v1038, 8.507059e+37
    %v1040 = vand.u32 %v1013, 2147483648
    %v1041 = vor.u32 1.1754944e-38, %v1040
    %v1042 = vsel %vm1039, %v1041, %v1037
    %v1043 = vmul.f32 1.0, %v1042
    %v1044 = vtanh.pop %v1005
    %1046 = vrot.lane.b32.xlu0 %v953, 64
    %v1047 = vpop.permute.xlu0 %1046
    %v1049 = vmul.f32 %v1028, %v1047
    %1051 = vrot.lane.b32.xlu0 %v1044, 64
    %v1052 = vpop.permute.xlu0 %1051
    %v1054 = vmul.f32 %v1028, %v1052
    %1056 = vrot.lane.b32.xlu0 %v1054, 64
    %v1057 = vpop.permute.xlu0 %1056
    %v1059 = vadd.f32 %v1049, %v1057
    %v1060 = vtanh.pop %v1059
    %1062 = vrot.lane.b32.xlu0 %v1060, 64
    %v1063 = vpop.permute.xlu0 %1062
    %v1065 = vmul.f32 %v1043, %v1063
    %v1066 = vsel %vm240, 6, 1
    %vm1067 = vcmp.lt.s32.totalorder %v1066, %v237
    %v1068 = vsel %vm1067, %v1065, %v948
    %1070 = vrot.lane.b32.xlu0 %v1059, 64
    %v1071 = vpop.permute.xlu0 %1070
    %v1073 = vsel %vm1067, %v1071, %v953
    %v1074 = vsel %vm1067, %v1065, 0.0
    %v1075 = vadd.f32 %v955, %v1074
    %s1076 = smul.u32 7, 2
    %s1077 = smul.addr %s1076, 8
    %s1078 = scalar_lea.vmem [#allocation2], %s1077
    %v1079 = vld [vmem:[%s1078] sm:$0xff]
    %v1080 = vld [vmem:[%s1078 + $0x8] sm:$0xff]
    %v1082 = vsel %vm95, %v1068, 0
    %1084 = vmatpush.msra.mxu0 0.0
    %1085 = vmatpush.msra.mxu0 0.0
    %1086 = vmatpush.msra.mxu0 0.0
    %1087 = vmatpush.msra.mxu0 0.0
    %1088 = vmatpush.msra.mxu0 0.0
    %1089 = vmatpush.msra.mxu0 0.0
    %1090 = vmatpush.msra.mxu0 0.0
    %1091 = vmatpush.msra.mxu0 0.0
    %1092 = vmatpush.msra.mxu0 %v232
    %1093 = vmatpush.msra.mxu0 %v230
    %1094 = vmatpush.msra.mxu0 %v228
    %1095 = vmatpush.msra.mxu0 %v226
    %1096 = vmatpush.msra.mxu0 %v224
    %1097 = vmatpush.msra.mxu0 %v222
    %1098 = vmatpush.msra.mxu0 %v220
    %1099 = vmatpush.msra.mxu0 %v218
    %1100 = vmatmul.f32.gmra.mxu0 %v1082
    %v1101 = vpop.f32.mrf.mxu0
    %v1102 = vadd.f32 0.0, %v1101
    %1103 = vdwg.mxu0
    %1104 = vmatpush.msra.mxu0 0.0
    %1105 = vmatpush.msra.mxu0 0.0
    %1106 = vmatpush.msra.mxu0 0.0
    %1107 = vmatpush.msra.mxu0 0.0
    %1108 = vmatpush.msra.mxu0 0.0
    %1109 = vmatpush.msra.mxu0 0.0
    %1110 = vmatpush.msra.mxu0 0.0
    %1111 = vmatpush.msra.mxu0 0.0
    %1112 = vmatpush.msra.mxu0 %v233
    %1113 = vmatpush.msra.mxu0 %v231
    %1114 = vmatpush.msra.mxu0 %v229
    %1115 = vmatpush.msra.mxu0 %v227
    %1116 = vmatpush.msra.mxu0 %v225
    %1117 = vmatpush.msra.mxu0 %v223
    %1118 = vmatpush.msra.mxu0 %v221
    %1119 = vmatpush.msra.mxu0 %v219
    %1120 = vmatmul.f32.gmra.mxu0 %v1082
    %v1121 = vpop.f32.mrf.mxu0
    %v1122 = vadd.f32 0.0, %v1121
    %1123 = vdwg.mxu0
    %v1124 = vadd.f32 %v1079, %v1102
    %v1125 = vadd.f32 %v1080, %v1122
    %v1126 = vxor.u32 %v1124, 2147483648
    %v1127 = vxor.u32 %v1125, 2147483648
    %v1128 = vmul.f32 %v1126, 1.442695
    %v1129 = vpow.pop %v1128
    %v1130 = vmul.f32 %v1127, 1.442695
    %v1131 = vpow.pop %v1130
    %v1132 = vadd.f32 %v1129, 1.0
    %v1133 = vadd.f32 %v1131, 1.0
    %v1134 = vrcp.pop %v1132
    %v1135 = vmul.f32 %v1132, %v1134
    %v1136 = vsub.f32 1.0, %v1135
    %v1137 = vmul.f32 %v1134, %v1136
    %v1138 = vadd.f32 %v1134, %v1137
    %vm1139 = vweird.f32 %v1132
    %vm1140 = vweird.f32 %v1134
    %vm1141 = vmor %vm1139, %vm1140
    %v1142 = vsel %vm1141, %v1134, %v1138
    %v1143 = vand.u32 2147483647, %v1132
    %vm1144 = vcmp.eq.f32.partialorder %v1143, 8.507059e+37
    %v1145 = vand.u32 %v1132, 2147483648
    %v1146 = vor.u32 1.1754944e-38, %v1145
    %v1147 = vsel %vm1144, %v1146, %v1142
    %v1148 = vmul.f32 1.0, %v1147
    %v1149 = vrcp.pop %v1133
    %v1150 = vmul.f32 %v1133, %v1149
    %v1151 = vsub.f32 1.0, %v1150
    %v1152 = vmul.f32 %v1149, %v1151
    %v1153 = vadd.f32 %v1149, %v1152
    %vm1154 = vweird.f32 %v1133
    %vm1155 = vweird.f32 %v1149
    %vm1156 = vmor %vm1154, %vm1155
    %v1157 = vsel %vm1156, %v1149, %v1153
    %v1158 = vand.u32 2147483647, %v1133
    %vm1159 = vcmp.eq.f32.partialorder %v1158, 8.507059e+37
    %v1160 = vand.u32 %v1133, 2147483648
    %v1161 = vor.u32 1.1754944e-38, %v1160
    %v1162 = vsel %vm1159, %v1161, %v1157
    %v1163 = vmul.f32 1.0, %v1162
    %v1164 = vtanh.pop %v1125
    %1166 = vrot.lane.b32.xlu0 %v1073, 64
    %v1167 = vpop.permute.xlu0 %1166
    %v1169 = vmul.f32 %v1148, %v1167
    %1171 = vrot.lane.b32.xlu0 %v1164, 64
    %v1172 = vpop.permute.xlu0 %1171
    %v1174 = vmul.f32 %v1148, %v1172
    %1176 = vrot.lane.b32.xlu0 %v1174, 64
    %v1177 = vpop.permute.xlu0 %1176
    %v1179 = vadd.f32 %v1169, %v1177
    %v1180 = vtanh.pop %v1179
    %1182 = vrot.lane.b32.xlu0 %v1180, 64
    %v1183 = vpop.permute.xlu0 %1182
    %v1185 = vmul.f32 %v1163, %v1183
    %v1186 = vsel %vm240, 7, 0
    %vm1187 = vcmp.lt.s32.totalorder %v1186, %v237
    %v1188 = vsel %vm1187, %v1185, 0.0
    %v1189 = vadd.f32 %v1075, %v1188
    %vm1190 = vcmp.gt.s32.totalorder %v234, 1
    %v1191 = vsel %vm1190, %v234, 1
    %v1192 = vcvt.s32.f32 %v1191
    %1194 = vset.pattern.permute.xlu0 0
    %1195 = vperm.xlu0 %1194, %v1192
    %v1196 = vpop.permute.xlu0 %1195
    %v1198 = vrcp.pop %v1196
    %v1199 = vmul.f32 %v1196, %v1198
    %v1200 = vsub.f32 1.0, %v1199
    %v1201 = vmul.f32 %v1198, %v1200
    %v1202 = vadd.f32 %v1198, %v1201
    %vm1203 = vweird.f32 %v1196
    %vm1204 = vweird.f32 %v1198
    %vm1205 = vmor %vm1203, %vm1204
    %v1206 = vsel %vm1205, %v1198, %v1202
    %v1207 = vand.u32 2147483647, %v1196
    %vm1208 = vcmp.eq.f32.partialorder %v1207, 8.507059e+37
    %v1209 = vand.u32 %v1196, 2147483648
    %v1210 = vor.u32 1.1754944e-38, %v1209
    %v1211 = vsel %vm1208, %v1210, %v1206
    %v1212 = vmul.f32 %v1189, %v1211
    %v1213 = vld [vmem:[%s5] sm:$0xff]
    %v1214 = vld [vmem:[%s5 + $0x8] sm:$0xff]
    %v1215 = vld [vmem:[%s5 + $0x10] sm:$0xff]
    %v1216 = vld [vmem:[%s5 + $0x18] sm:$0xff]
    %v1217 = vld [vmem:[%s5 + $0x20] sm:$0xff]
    %v1218 = vld [vmem:[%s5 + $0x28] sm:$0xff]
    %v1219 = vld [vmem:[%s5 + $0x30] sm:$0xff]
    %v1220 = vld [vmem:[%s5 + $0x38] sm:$0xff]
    %v1221 = vld [vmem:[%s6] sm:$0x1]
    %v1223 = vperm.slane %v1221, 0
    %v1226 = vsel %vm95, %v1212, 0
    %1228 = vmatpush.msra.mxu0 0.0
    %1229 = vmatpush.msra.mxu0 0.0
    %1230 = vmatpush.msra.mxu0 0.0
    %1231 = vmatpush.msra.mxu0 0.0
    %1232 = vmatpush.msra.mxu0 0.0
    %1233 = vmatpush.msra.mxu0 0.0
    %1234 = vmatpush.msra.mxu0 0.0
    %1235 = vmatpush.msra.mxu0 0.0
    %1236 = vmatpush.msra.mxu0 %v1220
    %1237 = vmatpush.msra.mxu0 %v1219
    %1238 = vmatpush.msra.mxu0 %v1218
    %1239 = vmatpush.msra.mxu0 %v1217
    %1240 = vmatpush.msra.mxu0 %v1216
    %1241 = vmatpush.msra.mxu0 %v1215
    %1242 = vmatpush.msra.mxu0 %v1214
    %1243 = vmatpush.msra.mxu0 %v1213
    %1244 = vmatmul.f32.gmra.mxu0 %v1226
    %v1245 = vpop.f32.mrf.mxu0
    %v1246 = vadd.f32 %v1223, %v1245
    %1247 = vdwg.mxu0
    %v1248 = vld [vmem:[%s7] sm:$0xff]
    %v1249 = vld [vmem:[%s7 + $0x8] sm:$0xff]
    %v1250 = vld [vmem:[%s7 + $0x10] sm:$0xff]
    %v1251 = vld [vmem:[%s7 + $0x18] sm:$0xff]
    %v1252 = vld [vmem:[%s8] sm:$0x1]
    %v1254 = vperm.slane %v1252, 0
    %vm1256 = vcmask 261120
    %v1258 = vsel %vm1256, %v1246, 0
    %1260 = vmatpush.msra.mxu0 0.0
    %1261 = vmatpush.msra.mxu0 0.0
    %1262 = vmatpush.msra.mxu0 0.0
    %1263 = vmatpush.msra.mxu0 0.0
    %1264 = vmatpush.msra.mxu0 0.0
    %1265 = vmatpush.msra.mxu0 0.0
    %1266 = vmatpush.msra.mxu0 0.0
    %1267 = vmatpush.msra.mxu0 0.0
    %1268 = vmatpush.msra.mxu0 0.0
    %1269 = vmatpush.msra.mxu0 0.0
    %1270 = vmatpush.msra.mxu0 0.0
    %1271 = vmatpush.msra.mxu0 0.0
    %1272 = vmatpush.msra.mxu0 %v1251
    %1273 = vmatpush.msra.mxu0 %v1250
    %1274 = vmatpush.msra.mxu0 %v1249
    %1275 = vmatpush.msra.mxu0 %v1248
    %1276 = vmatmul.f32.gmra.mxu0 %v1258
    %v1277 = vpop.f32.mrf.mxu0
    %v1278 = vadd.f32 %v1254, %v1277
    %1279 = vdwg.mxu0
    %vm1280 = vcmask 64512
    %1281 = vst.msk [vmem:[#allocation8] sm:$0xff] %vm1280, %v1278
    // Predicated region
    $region46: #{tpu_custom_call.1} parent=1 // pred_check
      _
    $region47: #{tpu_custom_call.1} parent=1 // pred_check_branch
      %1283 = sbr.rel (0) target = $region49
    $region48: #{tpu_custom_call.1} parent=1 // pred_region
      %1285 = vsyncadd [#allocation5], 0
      %s1287 = sshll.u32 [#allocation8], 4
      %s1288 = int_to_ptr.vmem [resolvable:$true] %s1287
      %s1289 = sshll.u32 %s9, 4
      %s1290 = int_to_ptr.hbm [resolvable:$true] %s1289
      %1292 = dma.vmem_to_hbm [thread:$0]  %s1288, 128, %s1290, [#allocation5]
    $region49: #{tpu_custom_call.1} parent=1 // pred_fallthru
      _
    // Predicated region
    $region50: #{tpu_custom_call.1} parent=1 // pred_check
      _
    $region51: #{tpu_custom_call.1} parent=1 // pred_check_branch
      %1294 = sbr.rel (0) target = $region53
    $region52: #{tpu_custom_call.1} parent=1 // pred_region
      %1296 = dma.done [#allocation5], 128
    $region53: #{tpu_custom_call.1} parent=1 // pred_fallthru
      _
    %1297 = vsyncpa [#allocation4], 1
    %1298 = vsyncpa [#allocation7], 1
    %1299 = vsyncpa [#allocation5], 1

</llo_original>
